<compile_context>
chip_gen: v7x
topology: tpu7x:2x2x1
jax: 0.10.0
libtpu: 0.0.40
codegen_flags: <defaults>
</compile_context>

<pallas_src>
import math

import jax
import jax.numpy as jnp
from jax.experimental import pallas as pl
from jax.experimental.pallas import tpu as pltpu


def _round_up(a, b):
    return (a + b - 1) // b * b


# ----------------------------- Pallas kernel --------------------------------

def _cppn_mlp_kernel(xyr_ref,    # (1, 3, RT)   f32  per-pixel x, y, r (pixels on lanes)
                     uz_ref,     # (1, NS, 1)   f32  per-image  linear1(z) + b1
                     wxyz_ref,   # (3, NS, 1)   f32  linear2/3/4 weight columns
                     w567_ref,   # (3, NS, NS)  bf16 transposed hidden-layer weights
                     b567_ref,   # (3, NS, 1)   f32  hidden-layer biases
                     w8_ref,     # (NS, 1)      f32  output weight column
                     b8_ref,     # (1, 1)       f32  output bias
                     out_ref):   # (1, 1, RT)   f32  sigmoid output (lane-dense)
    coords = xyr_ref[0]                               # (3, RT)
    x = coords[0:1, :]
    y = coords[1:2, :]
    r = coords[2:3, :]

    # Input layer on the VPU:  U^T = uz + w2*x + w3*y + w4*r   -> (NS, RT)
    u = (uz_ref[0]
         + wxyz_ref[0] * x
         + wxyz_ref[1] * y
         + wxyz_ref[2] * r)
    h = jnp.tanh(u)

    # Three net_size x net_size hidden layers on the MXU (bf16 in, f32 accumulate).
    for i in range(3):
        a = jnp.dot(w567_ref[i], h.astype(jnp.bfloat16),
                    preferred_element_type=jnp.float32) + b567_ref[i]
        h = jnp.tanh(a)

    # Output layer (net_size -> 1) as VPU multiply + sublane reduction; an MXU
    # matmul here would burn a full 128/256-wide pass on a single column.
    o = jnp.sum(h * w8_ref[...], axis=0, keepdims=True) + b8_ref[...]    # (1, RT)
    out_ref[0] = jax.nn.sigmoid(o)


# ------------------------------- wrapper -------------------------------------

def cppn_generator_forward(x, y, r, z, params, *, row_tile=2048,
                           vmem_limit_bytes=32 * 1024 * 1024):
    """CPPN generator forward.

    x, y, r : (B, N, 1) float32 coordinate channels.
    z       : (B, N, z_dim) latent tiled across the N points of each image
              (the standard CPPN usage in gan_cppn_casia.py), or (B, z_dim) /
              (B, 1, z_dim).
    Returns (B, N) float32 — identical to the PyTorch module's final view.
    """
    B, N, _ = x.shape
    NS = params["w5"].shape[0]
    assert params["w8"].shape[1] == 1, "kernel assumes c_dim == 1"

    # The CPPN generator broadcasts one latent per image across its N points,
    # so linear1(z)+b1 is a tiny per-image (B, NS) array: hoist it out of the
    # per-pixel kernel (drops the K=z_dim+3 MXU pass and ~12x per-pixel HBM).
    if z.ndim == 3:
        z_img = z[:, 0, :]          # latent is constant over the point axis
    else:
        z_img = z.reshape(B, -1)
    uz = jnp.dot(z_img.astype(jnp.float32), params["w1"]) + params["b1"]
    uz = uz.astype(jnp.float32).reshape(B, NS, 1)

    # Per-pixel coordinates with pixels on the lane (last) axis, padded to tile.
    rt = max(128, _round_up(min(int(row_tile), _round_up(N, 128)), 128))
    n_pad = _round_up(N, rt)
    xyr = jnp.swapaxes(jnp.concatenate([x, y, r], axis=-1), 1, 2)   # (B, 3, N)
    xyr = xyr.astype(jnp.float32)
    if n_pad != N:
        xyr = jnp.pad(xyr, ((0, 0), (0, 0), (0, n_pad - N)))

    # Weight packing (hidden weights transposed + bf16 for the MXU).
    wxyz = jnp.stack([params["w2"][0], params["w3"][0], params["w4"][0]],
                     axis=0).astype(jnp.float32).reshape(3, NS, 1)
    w567 = jnp.stack([params["w5"].T, params["w6"].T, params["w7"].T],
                     axis=0).astype(jnp.bfloat16)                    # (3, NS, NS)
    b567 = jnp.stack([params["b5"][0], params["b6"][0], params["b7"][0]],
                     axis=0).astype(jnp.float32).reshape(3, NS, 1)
    w8 = params["w8"].astype(jnp.float32)                            # (NS, 1)
    b8 = params["b8"].astype(jnp.float32).reshape(1, 1)

    grid = (B, n_pad // rt)
    const3 = lambda b, t: (0, 0, 0)

    out = pl.pallas_call(
        _cppn_mlp_kernel,
        out_shape=jax.ShapeDtypeStruct((B, 1, n_pad), jnp.float32),
        grid=grid,
        in_specs=[
            pl.BlockSpec((1, 3, rt), lambda b, t: (b, 0, t)),      # xyr
            pl.BlockSpec((1, NS, 1), lambda b, t: (b, 0, 0)),      # uz
            pl.BlockSpec((3, NS, 1), const3),                      # wxyz
            pl.BlockSpec((3, NS, NS), const3),                     # w567 (bf16)
            pl.BlockSpec((3, NS, 1), const3),                      # b567
            pl.BlockSpec((NS, 1), lambda b, t: (0, 0)),            # w8
            pl.BlockSpec((1, 1), lambda b, t: (0, 0)),             # b8
        ],
        out_specs=pl.BlockSpec((1, 1, rt), lambda b, t: (b, 0, t)),
        compiler_params=pltpu.CompilerParams(
            dimension_semantics=("parallel", "parallel"),
            vmem_limit_bytes=vmem_limit_bytes),
    )(xyr, uz, wxyz, w567, b567, w8, b8)

    # squeeze(2) + the (no-op) square view + final view(-1, H*W)  ==  (B, N).
    return out[:, 0, :N]


# --------------------------- parameter creation ------------------------------

def init_params(key, z_dim=32, net_size=128, c_dim=1):
    """Deterministic init mimicking nn.Linear default (U[-1/sqrt(fan_in), ..])."""
    def lin(k, fan_in, fan_out, bias=True):
        kw, kb = jax.random.split(k)
        bound = 1.0 / math.sqrt(fan_in)
        w = jax.random.uniform(kw, (fan_in, fan_out), jnp.float32, -bound, bound)
        b = (jax.random.uniform(kb, (1, fan_out), jnp.float32, -bound, bound)
             if bias else jnp.zeros((1, fan_out), jnp.float32))
        return w, b

    keys = jax.random.split(key, 8)
    p = {}
    p["w1"], p["b1"] = lin(keys[0], z_dim, net_size)            # linear1
    p["w2"], _ = lin(keys[1], 1, net_size, bias=False)          # linear2 (no bias)
    p["w3"], _ = lin(keys[2], 1, net_size, bias=False)          # linear3
    p["w4"], _ = lin(keys[3], 1, net_size, bias=False)          # linear4
    p["w5"], p["b5"] = lin(keys[4], net_size, net_size)         # linear5
    p["w6"], p["b6"] = lin(keys[5], net_size, net_size)         # linear6
    p["w7"], p["b7"] = lin(keys[6], net_size, net_size)         # linear7
    p["w8"], p["b8"] = lin(keys[7], net_size, c_dim)            # linear8
    return p


# ------------------------------ reference ------------------------------------

def reference_forward(x, y, r, z, p):
    U = (jnp.einsum("bnk,kf->bnf", z, p["w1"]) + p["b1"]
         + x * p["w2"][0] + y * p["w3"][0] + r * p["w4"][0])
    h = jnp.tanh(U)
    h = jnp.tanh(jnp.einsum("bnf,fg->bng", h, p["w5"]) + p["b5"])
    h = jnp.tanh(jnp.einsum("bnf,fg->bng", h, p["w6"]) + p["b6"])
    h = jnp.tanh(jnp.einsum("bnf,fg->bng", h, p["w7"]) + p["b7"])
    o = jax.nn.sigmoid(jnp.einsum("bnf,fc->bnc", h, p["w8"]) + p["b8"])
    B, N, _ = z.shape
    return o[..., 0].reshape(B, N)


# --------------------------------- main ---------------------------------------

if __name__ == "__main__":
    key = jax.random.PRNGKey(0)
    k_param, k_z = jax.random.split(key)

    # Small CPPN image: x_dim = y_dim = 12  ->  N = 144 points per image, B = 2.
    # (N is deliberately not a multiple of 128 to exercise the padded final tile.)
    B, x_dim, y_dim, z_dim, net_size, c_dim, scale = 2, 12, 12, 32, 128, 1, 8.0
    N = x_dim * y_dim

    # Coordinate grids (the usual CPPN x/y/r construction), shape (B, N, 1).
    xs = (jnp.arange(x_dim, dtype=jnp.float32) - (x_dim - 1) / 2.0) / x_dim * scale
    ys = (jnp.arange(y_dim, dtype=jnp.float32) - (y_dim - 1) / 2.0) / y_dim * scale
    xg, yg = jnp.meshgrid(xs, ys, indexing="ij")
    rg = jnp.sqrt(xg * xg + yg * yg)
    x = jnp.tile(xg.reshape(1, N, 1), (B, 1, 1))
    y = jnp.tile(yg.reshape(1, N, 1), (B, 1, 1))
    r = jnp.tile(rg.reshape(1, N, 1), (B, 1, 1))

    # Latent z, tiled across all N points of an image (standard CPPN usage).
    z_lat = jax.random.normal(k_z, (B, 1, z_dim), jnp.float32)
    z = jnp.tile(z_lat, (1, N, 1))                       # module-style (B, N, z_dim)

    params = init_params(k_param, z_dim=z_dim, net_size=net_size, c_dim=c_dim)

    out = cppn_generator_forward(x, y, r, z, params, row_tile=2048)
    out = jax.block_until_ready(out)

    ref = reference_forward(x, y, r, z, params)
    assert out.shape == (B, N)
    # bf16 MXU matmuls (f32 accumulation) -> relaxed tolerance vs the f32 reference.
    assert jnp.allclose(out, ref, atol=3e-2, rtol=3e-2), "mismatch vs reference"

    print("KERNEL_OK")
</pallas_src>

<mosaic_0001>
module attributes {stable_mosaic.version = 11 : i64} {
  func.func @_cppn_mlp_kernel(%arg0: i32, %arg1: i32, %arg2: memref<1x3x256xf32, #tpu.memory_space<vmem>>, %arg3: memref<1x128x1xf32, #tpu.memory_space<vmem>>, %arg4: memref<3x128x1xf32, #tpu.memory_space<vmem>>, %arg5: memref<3x128x128xbf16, #tpu.memory_space<vmem>>, %arg6: memref<3x128x1xf32, #tpu.memory_space<vmem>>, %arg7: memref<128x1xf32, #tpu.memory_space<vmem>>, %arg8: memref<1x1xf32, #tpu.memory_space<vmem>>, %arg9: memref<1x1x256xf32, #tpu.memory_space<vmem>>) attributes {dimension_semantics = [#tpu.dimension_semantics<parallel>, #tpu.dimension_semantics<parallel>], iteration_bounds = array<i64: 2, 1>, scalar_prefetch = 0 : i64, scratch_operands = 0 : i64, tpu.core_type = #tpu.core_type<tc>, window_params = [{transform_indices = @transform_0, window_bounds = array<i64: 1, 3, 256>}, {transform_indices = @transform_1, window_bounds = array<i64: 1, 128, 1>}, {pipeline_mode = #tpu.pipeline_mode<synchronous>, transform_indices = @transform_2, window_bounds = array<i64: 3, 128, 1>}, {pipeline_mode = #tpu.pipeline_mode<synchronous>, transform_indices = @transform_3, window_bounds = array<i64: 3, 128, 128>}, {pipeline_mode = #tpu.pipeline_mode<synchronous>, transform_indices = @transform_4, window_bounds = array<i64: 3, 128, 1>}, {pipeline_mode = #tpu.pipeline_mode<synchronous>, transform_indices = @transform_5, window_bounds = array<i64: 128, 1>}, {pipeline_mode = #tpu.pipeline_mode<synchronous>, transform_indices = @transform_6, window_bounds = array<i64: 1, 1>}, {transform_indices = @transform_7, window_bounds = array<i64: 1, 1, 256>}]} {
    %c0 = arith.constant 0 : index
    %c0_0 = arith.constant 0 : index
    %c0_1 = arith.constant 0 : index
    %0 = vector.load %arg2[%c0, %c0_0, %c0_1] : memref<1x3x256xf32, #tpu.memory_space<vmem>>, vector<1x3x256xf32>
    %1 = vector.shape_cast %0 : vector<1x3x256xf32> to vector<3x256xf32>
    %2 = vector.extract_strided_slice %1 {offsets = [0, 0], sizes = [1, 256], strides = [1, 1]} : vector<3x256xf32> to vector<1x256xf32>
    %3 = vector.extract_strided_slice %1 {offsets = [1, 0], sizes = [1, 256], strides = [1, 1]} : vector<3x256xf32> to vector<1x256xf32>
    %4 = vector.extract_strided_slice %1 {offsets = [2, 0], sizes = [1, 256], strides = [1, 1]} : vector<3x256xf32> to vector<1x256xf32>
    %c0_2 = arith.constant 0 : index
    %c0_3 = arith.constant 0 : index
    %c0_4 = arith.constant 0 : index
    %5 = vector.load %arg3[%c0_2, %c0_3, %c0_4] : memref<1x128x1xf32, #tpu.memory_space<vmem>>, vector<1x128x1xf32>
    %6 = vector.shape_cast %5 : vector<1x128x1xf32> to vector<128x1xf32>
    %c0_5 = arith.constant 0 : index
    %c0_6 = arith.constant 0 : index
    %c0_7 = arith.constant 0 : index
    %7 = vector.load %arg4[%c0_5, %c0_6, %c0_7] : memref<3x128x1xf32, #tpu.memory_space<vmem>>, vector<1x128x1xf32>
    %8 = vector.shape_cast %7 : vector<1x128x1xf32> to vector<128x1xf32>
    %9 = vector.broadcast %8 : vector<128x1xf32> to vector<128x256xf32>
    %10 = vector.broadcast %2 : vector<1x256xf32> to vector<128x256xf32>
    %11 = arith.mulf %9, %10 : vector<128x256xf32>
    %12 = vector.broadcast %6 : vector<128x1xf32> to vector<128x256xf32>
    %13 = arith.addf %12, %11 : vector<128x256xf32>
    %c1 = arith.constant 1 : index
    %c0_8 = arith.constant 0 : index
    %c0_9 = arith.constant 0 : index
    %14 = vector.load %arg4[%c1, %c0_8, %c0_9] : memref<3x128x1xf32, #tpu.memory_space<vmem>>, vector<1x128x1xf32>
    %15 = vector.shape_cast %14 : vector<1x128x1xf32> to vector<128x1xf32>
    %16 = vector.broadcast %15 : vector<128x1xf32> to vector<128x256xf32>
    %17 = vector.broadcast %3 : vector<1x256xf32> to vector<128x256xf32>
    %18 = arith.mulf %16, %17 : vector<128x256xf32>
    %19 = arith.addf %13, %18 : vector<128x256xf32>
    %c2 = arith.constant 2 : index
    %c0_10 = arith.constant 0 : index
    %c0_11 = arith.constant 0 : index
    %20 = vector.load %arg4[%c2, %c0_10, %c0_11] : memref<3x128x1xf32, #tpu.memory_space<vmem>>, vector<1x128x1xf32>
    %21 = vector.shape_cast %20 : vector<1x128x1xf32> to vector<128x1xf32>
    %22 = vector.broadcast %21 : vector<128x1xf32> to vector<128x256xf32>
    %23 = vector.broadcast %4 : vector<1x256xf32> to vector<128x256xf32>
    %24 = arith.mulf %22, %23 : vector<128x256xf32>
    %25 = arith.addf %19, %24 : vector<128x256xf32>
    %26 = math.tanh %25 : vector<128x256xf32>
    %c0_12 = arith.constant 0 : index
    %c0_13 = arith.constant 0 : index
    %c0_14 = arith.constant 0 : index
    %27 = vector.load %arg5[%c0_12, %c0_13, %c0_14] : memref<3x128x128xbf16, #tpu.memory_space<vmem>>, vector<1x128x128xbf16>
    %28 = vector.shape_cast %27 : vector<1x128x128xbf16> to vector<128x128xbf16>
    %29 = arith.truncf %26 : vector<128x256xf32> to vector<128x256xbf16>
    %cst = arith.constant dense<0.000000e+00> : vector<128x256xf32>
    %30 = tpu.matmul %28, %29, %cst {dimension_numbers = #tpu.dot_dimension_numbers<[1], [0], [0], [1], [0, 0, 1, 1], [], []>} : vector<128x128xbf16>, vector<128x256xbf16>, vector<128x256xf32> -> vector<128x256xf32>
    %c0_15 = arith.constant 0 : index
    %c0_16 = arith.constant 0 : index
    %c0_17 = arith.constant 0 : index
    %31 = vector.load %arg6[%c0_15, %c0_16, %c0_17] : memref<3x128x1xf32, #tpu.memory_space<vmem>>, vector<1x128x1xf32>
    %32 = vector.shape_cast %31 : vector<1x128x1xf32> to vector<128x1xf32>
    %33 = vector.broadcast %32 : vector<128x1xf32> to vector<128x256xf32>
    %34 = arith.addf %30, %33 : vector<128x256xf32>
    %35 = math.tanh %34 : vector<128x256xf32>
    %c1_18 = arith.constant 1 : index
    %c0_19 = arith.constant 0 : index
    %c0_20 = arith.constant 0 : index
    %36 = vector.load %arg5[%c1_18, %c0_19, %c0_20] : memref<3x128x128xbf16, #tpu.memory_space<vmem>>, vector<1x128x128xbf16>
    %37 = vector.shape_cast %36 : vector<1x128x128xbf16> to vector<128x128xbf16>
    %38 = arith.truncf %35 : vector<128x256xf32> to vector<128x256xbf16>
    %cst_21 = arith.constant dense<0.000000e+00> : vector<128x256xf32>
    %39 = tpu.matmul %37, %38, %cst_21 {dimension_numbers = #tpu.dot_dimension_numbers<[1], [0], [0], [1], [0, 0, 1, 1], [], []>} : vector<128x128xbf16>, vector<128x256xbf16>, vector<128x256xf32> -> vector<128x256xf32>
    %c1_22 = arith.constant 1 : index
    %c0_23 = arith.constant 0 : index
    %c0_24 = arith.constant 0 : index
    %40 = vector.load %arg6[%c1_22, %c0_23, %c0_24] : memref<3x128x1xf32, #tpu.memory_space<vmem>>, vector<1x128x1xf32>
    %41 = vector.shape_cast %40 : vector<1x128x1xf32> to vector<128x1xf32>
    %42 = vector.broadcast %41 : vector<128x1xf32> to vector<128x256xf32>
    %43 = arith.addf %39, %42 : vector<128x256xf32>
    %44 = math.tanh %43 : vector<128x256xf32>
    %c2_25 = arith.constant 2 : index
    %c0_26 = arith.constant 0 : index
    %c0_27 = arith.constant 0 : index
    %45 = vector.load %arg5[%c2_25, %c0_26, %c0_27] : memref<3x128x128xbf16, #tpu.memory_space<vmem>>, vector<1x128x128xbf16>
    %46 = vector.shape_cast %45 : vector<1x128x128xbf16> to vector<128x128xbf16>
    %47 = arith.truncf %44 : vector<128x256xf32> to vector<128x256xbf16>
    %cst_28 = arith.constant dense<0.000000e+00> : vector<128x256xf32>
    %48 = tpu.matmul %46, %47, %cst_28 {dimension_numbers = #tpu.dot_dimension_numbers<[1], [0], [0], [1], [0, 0, 1, 1], [], []>} : vector<128x128xbf16>, vector<128x256xbf16>, vector<128x256xf32> -> vector<128x256xf32>
    %c2_29 = arith.constant 2 : index
    %c0_30 = arith.constant 0 : index
    %c0_31 = arith.constant 0 : index
    %49 = vector.load %arg6[%c2_29, %c0_30, %c0_31] : memref<3x128x1xf32, #tpu.memory_space<vmem>>, vector<1x128x1xf32>
    %50 = vector.shape_cast %49 : vector<1x128x1xf32> to vector<128x1xf32>
    %51 = vector.broadcast %50 : vector<128x1xf32> to vector<128x256xf32>
    %52 = arith.addf %48, %51 : vector<128x256xf32>
    %53 = math.tanh %52 : vector<128x256xf32>
    %c0_32 = arith.constant 0 : index
    %c0_33 = arith.constant 0 : index
    %54 = vector.load %arg7[%c0_32, %c0_33] : memref<128x1xf32, #tpu.memory_space<vmem>>, vector<128x1xf32>
    %55 = vector.broadcast %54 : vector<128x1xf32> to vector<128x256xf32>
    %56 = arith.mulf %53, %55 : vector<128x256xf32>
    %cst_34 = arith.constant dense<0.000000e+00> : vector<256xf32>
    %57 = vector.multi_reduction <add>, %56, %cst_34 [0] : vector<128x256xf32> to vector<256xf32>
    %58 = vector.shape_cast %57 : vector<256xf32> to vector<1x256xf32>
    %c0_35 = arith.constant 0 : index
    %c0_36 = arith.constant 0 : index
    %59 = vector.load %arg8[%c0_35, %c0_36] : memref<1x1xf32, #tpu.memory_space<vmem>>, vector<1x1xf32>
    %60 = vector.broadcast %59 : vector<1x1xf32> to vector<1x256xf32>
    %61 = arith.addf %58, %60 : vector<1x256xf32>
    %62 = arith.negf %61 : vector<1x256xf32>
    %63 = math.exp %62 : vector<1x256xf32>
    %cst_37 = arith.constant 1.000000e+00 : f32
    %64 = vector.broadcast %cst_37 : f32 to vector<1x256xf32>
    %65 = arith.addf %64, %63 : vector<1x256xf32>
    %66 = arith.divf %64, %65 : vector<1x256xf32>
    %c0_38 = arith.constant 0 : index
    %c0_39 = arith.constant 0 : index
    %c0_40 = arith.constant 0 : index
    %67 = vector.load %arg9[%c0_38, %c0_39, %c0_40] : memref<1x1x256xf32, #tpu.memory_space<vmem>>, vector<1x1x256xf32>
    %68 = vector.shape_cast %67 : vector<1x1x256xf32> to vector<1x256xf32>
    %69 = vector.shape_cast %66 : vector<1x256xf32> to vector<1x1x256xf32>
    tpu.vector_store %arg9[%c0_38, %c0_39, %c0_40], %69 {strides = array<i32>} : memref<1x1x256xf32, #tpu.memory_space<vmem>>, vector<1x1x256xf32>,
    return
  }
  func.func @transform_0(%arg0: i32, %arg1: i32) -> (i32, i32, i32) {
    %c0_i32 = arith.constant 0 : i32
    %c0_i32_0 = arith.constant 0 : i32
    return %arg0, %c0_i32, %arg1 : i32, i32, i32
  }
  func.func @transform_1(%arg0: i32, %arg1: i32) -> (i32, i32, i32) {
    %c0_i32 = arith.constant 0 : i32
    %c0_i32_0 = arith.constant 0 : i32
    %c0_i32_1 = arith.constant 0 : i32
    return %arg0, %c0_i32, %c0_i32_0 : i32, i32, i32
  }
  func.func @transform_2(%arg0: i32, %arg1: i32) -> (i32, i32, i32) {
    %c0_i32 = arith.constant 0 : i32
    %c0_i32_0 = arith.constant 0 : i32
    %c0_i32_1 = arith.constant 0 : i32
    %c0_i32_2 = arith.constant 0 : i32
    return %c0_i32, %c0_i32_0, %c0_i32_1 : i32, i32, i32
  }
  func.func @transform_3(%arg0: i32, %arg1: i32) -> (i32, i32, i32) {
    %c0_i32 = arith.constant 0 : i32
    %c0_i32_0 = arith.constant 0 : i32
    %c0_i32_1 = arith.constant 0 : i32
    %c0_i32_2 = arith.constant 0 : i32
    return %c0_i32, %c0_i32_0, %c0_i32_1 : i32, i32, i32
  }
  func.func @transform_4(%arg0: i32, %arg1: i32) -> (i32, i32, i32) {
    %c0_i32 = arith.constant 0 : i32
    %c0_i32_0 = arith.constant 0 : i32
    %c0_i32_1 = arith.constant 0 : i32
    %c0_i32_2 = arith.constant 0 : i32
    return %c0_i32, %c0_i32_0, %c0_i32_1 : i32, i32, i32
  }
  func.func @transform_5(%arg0: i32, %arg1: i32) -> (i32, i32) {
    %c0_i32 = arith.constant 0 : i32
    %c0_i32_0 = arith.constant 0 : i32
    %c0_i32_1 = arith.constant 0 : i32
    return %c0_i32, %c0_i32_0 : i32, i32
  }
  func.func @transform_6(%arg0: i32, %arg1: i32) -> (i32, i32) {
    %c0_i32 = arith.constant 0 : i32
    %c0_i32_0 = arith.constant 0 : i32
    %c0_i32_1 = arith.constant 0 : i32
    return %c0_i32, %c0_i32_0 : i32, i32
  }
  func.func @transform_7(%arg0: i32, %arg1: i32) -> (i32, i32, i32) {
    %c0_i32 = arith.constant 0 : i32
    %c0_i32_0 = arith.constant 0 : i32
    return %arg0, %c0_i32, %arg1 : i32, i32, i32
  }
}

</mosaic_0001>

<llo_original>
// kernel: tpu_custom_call.1
$region0: #{tpu_custom_call.1}
  #allocation0 [shape = 'u32[]', space=smem, size = 0x4, offset = 0x4, fixed_abs, tag = 'smem constant byte address 0x4 - core index']
  #allocation1 [shape = 'u32[144,128]{1,0:T(1,128)}', space=vmem, size = 0x12000, scoped, tag = 'internal scratch']
  #allocation2 [shape = 'f32[1,1]{1,0:T(1,128)S(1)}', space=vmem, size = 0x200, scoped, tag = 'scoped memory for tpu_custom_call.1']
  %s0 = inlined_call_operand.vmem [shape: f32[2,3,256], index: 0, kind: input, shape index: {}]
  %s1 = inlined_call_operand.vmem [shape: f32[2,128,1], index: 1, kind: input, shape index: {}]
  %s2 = inlined_call_operand.vmem [shape: f32[3,128,1], index: 2, kind: input, shape index: {}]
  %s3 = inlined_call_operand.vmem [shape: bf16[3,128,128], index: 3, kind: input, shape index: {}]
  %s4 = inlined_call_operand.vmem [shape: f32[3,128,1], index: 4, kind: input, shape index: {}]
  %s5 = inlined_call_operand.vmem [shape: f32[128,1], index: 5, kind: input, shape index: {}]
  %s6 = inlined_call_operand.<no memory space> [shape: f32[1,1], index: 6, kind: input, shape index: {}]
  %s7 = inlined_call_operand.hbm [shape: f32[2,1,256], index: 7, kind: output, shape index: {}]
  %s8 = sld [smem:[#allocation0]]
  $region61: #{tpu_custom_call.1} parent=0
    _
  %s10 = ssub.s32 1, %s8
  %s11 = scalar_select 0, %s10, %s8
  %v12 = vstv %s6
  %13 = vst [vmem:[#allocation2] sm:$0x1] %v12
  $region1: #{tpu_custom_call.1} parent=0
    #allocation3 [shape = 'u8[2048]{0}', space=vmem, size = 0x800, scoped, tag = 'output window, operand 0']
    #allocation4 [shape = 's32[2]{0}', space=sflag, size = 0x8, scoped, tag = 'scoped memory for tpu_custom_call.1']
    %14 = vsyncpa [#allocation4], 0
    %s15 = scalar_lea.sflag [#allocation4], 1
    %16 = vsyncpa %s15, 0
    loop: start=0, step=1, limit=4
    $region2: #{tpu_custom_call.1} parent=1 // loop_pre_header
      _
    $region3: #{tpu_custom_call.1} parent=1 // loop_header
      %s18 = sphi 0, %s22
      %p19 = scmp.ge.s32.totalorder %s18, 4
      %s25 = sphi 0, %s37
      %s26 = sphi 0, %s33
      %s27 = sphi 0, %s25
      %s28 = sphi 0, %s26
      %s29 = sphi 0, %s27
      %s30 = sphi 0, %s28
      %s42 = sphi 0, %s44
      %s45 = sphi 0, %s42
      %s46 = sphi 0, %s45
      %s62 = sphi 0, %s46
      %s68 = sphi 0, %s70
      %s71 = sphi 0, %s68
      %s72 = sphi 0, %s71
      %s88 = sphi 0, %s72
      %s92 = sphi 0, %s92
      %s94 = sphi 0, %s92
      %s95 = sphi 0, %s94
      %s109 = sphi 0, %s95
      %s113 = sphi 0, %s113
      %s115 = sphi 0, %s113
      %s116 = sphi 0, %s115
      %s130 = sphi 0, %s116
      %s134 = sphi 0, %s134
      %s136 = sphi 0, %s134
      %s137 = sphi 0, %s136
      %s151 = sphi 0, %s137
      %s155 = sphi 0, %s155
      %s157 = sphi 0, %s155
      %s158 = sphi 0, %s157
      %s172 = sphi 0, %s158
      %s176 = sphi 0, %s176
      %s178 = sphi 0, %s176
      %s179 = sphi 0, %s178
      %s193 = sphi 0, %s179
      %s201 = sphi 0, %s203
      %s204 = sphi 0, %s201
      %s205 = sphi 0, %s204
      %s221 = sphi 0, %s205
    $region4: #{tpu_custom_call.1} parent=1 // loop_header_branch
      %21 = sbr.rel (%p19) target = $region8
    $region5: #{tpu_custom_call.1} parent=1 // loop_body
      %s23 = ssub.s32 %s18, 1
      %s24 = ssub.s32 %s18, 2
      %s31 = sadd.s32 1, %s26
      %p32 = scmp.ge.s32.totalorder %s31, 1
      %s33 = scalar_select %p32, 0, %s31
      %s34 = sadd.s32 1, %s25
      %s35 = scalar_select %p32, %s34, %s25
      %p36 = scmp.ge.s32.totalorder %s35, 2
      %s37 = scalar_select %p36, 0, %s35
      %s38 = ssub.s32 %s25, %s37
      %s39 = ssub.s32 %s26, %s33
      %s40 = sor.u32 %s38, %s39
      %p41 = scmp.eq.s32.totalorder %s40, 0
      %s43 = sadd.s32 %s42, 1
      %s44 = scalar_select %p41, %s42, %s43
      %p47 = pneg %p41
      %p48 = scmp.eq.s32.totalorder %s18, 1
      %p49 = por %p47, %p48
      %p50 = scmp.ne.s32.totalorder %s42, %s45
      %p51 = scmp.eq.s32.totalorder %s18, 0
      %p52 = por %p50, %p51
      %p53 = scmp.ne.s32.totalorder %s42, %s45
      %p54 = scmp.eq.s32.totalorder %s23, 1
      %p55 = por %p53, %p54
      %p56 = scmp.ne.s32.totalorder %s45, %s46
      %p57 = scmp.eq.s32.totalorder %s23, 0
      %p58 = por %p56, %p57
      %p59 = scmp.ne.s32.totalorder %s45, %s46
      %p60 = scmp.eq.s32.totalorder %s24, 1
      %p61 = por %p59, %p60
      %p63 = scmp.ne.s32.totalorder %s46, %s62
      %p64 = scmp.eq.s32.totalorder %s24, 0
      %p65 = por %p63, %p64
      %s66 = ssub.s32 %s25, %s37
      %p67 = scmp.eq.s32.totalorder %s66, 0
      %s69 = sadd.s32 %s68, 1
      %s70 = scalar_select %p67, %s68, %s69
      %p73 = pneg %p67
      %p74 = scmp.eq.s32.totalorder %s18, 1
      %p75 = por %p73, %p74
      %p76 = scmp.ne.s32.totalorder %s68, %s71
      %p77 = scmp.eq.s32.totalorder %s18, 0
      %p78 = por %p76, %p77
      %p79 = scmp.ne.s32.totalorder %s68, %s71
      %p80 = scmp.eq.s32.totalorder %s23, 1
      %p81 = por %p79, %p80
      %p82 = scmp.ne.s32.totalorder %s71, %s72
      %p83 = scmp.eq.s32.totalorder %s23, 0
      %p84 = por %p82, %p83
      %p85 = scmp.ne.s32.totalorder %s71, %s72
      %p86 = scmp.eq.s32.totalorder %s24, 1
      %p87 = por %p85, %p86
      %p89 = scmp.ne.s32.totalorder %s72, %s88
      %p90 = scmp.eq.s32.totalorder %s24, 0
      %p91 = por %p89, %p90
      %s93 = sadd.s32 %s92, 1
      %p96 = scmp.eq.s32.totalorder %s18, 1
      %p97 = scmp.ne.s32.totalorder %s92, %s94
      %p98 = scmp.eq.s32.totalorder %s18, 0
      %p99 = por %p97, %p98
      %p100 = scmp.ne.s32.totalorder %s92, %s94
      %p101 = scmp.eq.s32.totalorder %s23, 1
      %p102 = por %p100, %p101
      %p103 = scmp.ne.s32.totalorder %s94, %s95
      %p104 = scmp.eq.s32.totalorder %s23, 0
      %p105 = por %p103, %p104
      %p106 = scmp.ne.s32.totalorder %s94, %s95
      %p107 = scmp.eq.s32.totalorder %s24, 1
      %p108 = por %p106, %p107
      %p110 = scmp.ne.s32.totalorder %s95, %s109
      %p111 = scmp.eq.s32.totalorder %s24, 0
      %p112 = por %p110, %p111
      %s114 = sadd.s32 %s113, 1
      %p117 = scmp.eq.s32.totalorder %s18, 1
      %p118 = scmp.ne.s32.totalorder %s113, %s115
      %p119 = scmp.eq.s32.totalorder %s18, 0
      %p120 = por %p118, %p119
      %p121 = scmp.ne.s32.totalorder %s113, %s115
      %p122 = scmp.eq.s32.totalorder %s23, 1
      %p123 = por %p121, %p122
      %p124 = scmp.ne.s32.totalorder %s115, %s116
      %p125 = scmp.eq.s32.totalorder %s23, 0
      %p126 = por %p124, %p125
      %p127 = scmp.ne.s32.totalorder %s115, %s116
      %p128 = scmp.eq.s32.totalorder %s24, 1
      %p129 = por %p127, %p128
      %p131 = scmp.ne.s32.totalorder %s116, %s130
      %p132 = scmp.eq.s32.totalorder %s24, 0
      %p133 = por %p131, %p132
      %s135 = sadd.s32 %s134, 1
      %p138 = scmp.eq.s32.totalorder %s18, 1
      %p139 = scmp.ne.s32.totalorder %s134, %s136
      %p140 = scmp.eq.s32.totalorder %s18, 0
      %p141 = por %p139, %p140
      %p142 = scmp.ne.s32.totalorder %s134, %s136
      %p143 = scmp.eq.s32.totalorder %s23, 1
      %p144 = por %p142, %p143
      %p145 = scmp.ne.s32.totalorder %s136, %s137
      %p146 = scmp.eq.s32.totalorder %s23, 0
      %p147 = por %p145, %p146
      %p148 = scmp.ne.s32.totalorder %s136, %s137
      %p149 = scmp.eq.s32.totalorder %s24, 1
      %p150 = por %p148, %p149
      %p152 = scmp.ne.s32.totalorder %s137, %s151
      %p153 = scmp.eq.s32.totalorder %s24, 0
      %p154 = por %p152, %p153
      %s156 = sadd.s32 %s155, 1
      %p159 = scmp.eq.s32.totalorder %s18, 1
      %p160 = scmp.ne.s32.totalorder %s155, %s157
      %p161 = scmp.eq.s32.totalorder %s18, 0
      %p162 = por %p160, %p161
      %p163 = scmp.ne.s32.totalorder %s155, %s157
      %p164 = scmp.eq.s32.totalorder %s23, 1
      %p165 = por %p163, %p164
      %p166 = scmp.ne.s32.totalorder %s157, %s158
      %p167 = scmp.eq.s32.totalorder %s23, 0
      %p168 = por %p166, %p167
      %p169 = scmp.ne.s32.totalorder %s157, %s158
      %p170 = scmp.eq.s32.totalorder %s24, 1
      %p171 = por %p169, %p170
      %p173 = scmp.ne.s32.totalorder %s158, %s172
      %p174 = scmp.eq.s32.totalorder %s24, 0
      %p175 = por %p173, %p174
      %s177 = sadd.s32 %s176, 1
      %p180 = scmp.eq.s32.totalorder %s18, 1
      %p181 = scmp.ne.s32.totalorder %s176, %s178
      %p182 = scmp.eq.s32.totalorder %s18, 0
      %p183 = por %p181, %p182
      %p184 = scmp.ne.s32.totalorder %s176, %s178
      %p185 = scmp.eq.s32.totalorder %s23, 1
      %p186 = por %p184, %p185
      %p187 = scmp.ne.s32.totalorder %s178, %s179
      %p188 = scmp.eq.s32.totalorder %s23, 0
      %p189 = por %p187, %p188
      %p190 = scmp.ne.s32.totalorder %s178, %s179
      %p191 = scmp.eq.s32.totalorder %s24, 1
      %p192 = por %p190, %p191
      %p194 = scmp.ne.s32.totalorder %s179, %s193
      %p195 = scmp.eq.s32.totalorder %s24, 0
      %p196 = por %p194, %p195
      %s197 = ssub.s32 %s25, %s37
      %s198 = ssub.s32 %s26, %s33
      %s199 = sor.u32 %s197, %s198
      %p200 = scmp.eq.s32.totalorder %s199, 0
      %s202 = sadd.s32 %s201, 1
      %s203 = scalar_select %p200, %s201, %s202
      %p206 = pneg %p200
      %p207 = scmp.eq.s32.totalorder %s18, 1
      %p208 = por %p206, %p207
      %p209 = scmp.ne.s32.totalorder %s201, %s204
      %p210 = scmp.eq.s32.totalorder %s18, 0
      %p211 = por %p209, %p210
      %p212 = scmp.ne.s32.totalorder %s201, %s204
      %p213 = scmp.eq.s32.totalorder %s23, 1
      %p214 = por %p212, %p213
      %p215 = scmp.ne.s32.totalorder %s204, %s205
      %p216 = scmp.eq.s32.totalorder %s23, 0
      %p217 = por %p215, %p216
      %p218 = scmp.ne.s32.totalorder %s204, %s205
      %p219 = scmp.eq.s32.totalorder %s24, 1
      %p220 = por %p218, %p219
      %p222 = scmp.ne.s32.totalorder %s205, %s221
      %p223 = scmp.eq.s32.totalorder %s24, 0
      %p224 = por %p222, %p223
      %p225 = scmp.le.s32.totalorder 1, %s18
      %p226 = scmp.lt.s32.totalorder %s18, 3
      %p227 = pnand %p225, %p226
      %p228 = pneg %p227
      // Predicated region
      $region9: #{tpu_custom_call.1} parent=5 // pred_check
        _
      $region10: #{tpu_custom_call.1} parent=5 // pred_check_branch
        %230 = sbr.rel (%p227) target = $region12
      $region11: #{tpu_custom_call.1} parent=5 // pred_region
        %s231 = ssub.s32 %s18, 1
        // Predicated region
        $region13: #{tpu_custom_call.1} parent=11 // pred_check
          %p232 = pneg %p105
        $region14: #{tpu_custom_call.1} parent=11 // pred_check_branch
          %234 = sbr.rel (%p232) target = $region16
        $region15: #{tpu_custom_call.1} parent=11 // pred_region
          _
        $region16: #{tpu_custom_call.1} parent=11 // pred_fallthru
          _
        // Predicated region
        $region17: #{tpu_custom_call.1} parent=11 // pred_check
          %p235 = pneg %p126
        $region18: #{tpu_custom_call.1} parent=11 // pred_check_branch
          %237 = sbr.rel (%p235) target = $region20
        $region19: #{tpu_custom_call.1} parent=11 // pred_region
          _
        $region20: #{tpu_custom_call.1} parent=11 // pred_fallthru
          _
        // Predicated region
        $region21: #{tpu_custom_call.1} parent=11 // pred_check
          %p238 = pneg %p147
        $region22: #{tpu_custom_call.1} parent=11 // pred_check_branch
          %240 = sbr.rel (%p238) target = $region24
        $region23: #{tpu_custom_call.1} parent=11 // pred_region
          _
        $region24: #{tpu_custom_call.1} parent=11 // pred_fallthru
          _
        // Predicated region
        $region25: #{tpu_custom_call.1} parent=11 // pred_check
          %p241 = pneg %p168
        $region26: #{tpu_custom_call.1} parent=11 // pred_check_branch
          %243 = sbr.rel (%p241) target = $region28
        $region27: #{tpu_custom_call.1} parent=11 // pred_region
          _
        $region28: #{tpu_custom_call.1} parent=11 // pred_fallthru
          _
        // Predicated region
        $region29: #{tpu_custom_call.1} parent=11 // pred_check
          %p244 = pneg %p189
        $region30: #{tpu_custom_call.1} parent=11 // pred_check_branch
          %246 = sbr.rel (%p244) target = $region32
        $region31: #{tpu_custom_call.1} parent=11 // pred_region
          _
        $region32: #{tpu_custom_call.1} parent=11 // pred_fallthru
          _
      $region12: #{tpu_custom_call.1} parent=5 // pred_fallthru
        _
      %p247 = scmp.lt.s32.totalorder %s18, 2
      // Predicated region
      $region33: #{tpu_custom_call.1} parent=5 // pred_check
        %p248 = pneg %p247
      $region34: #{tpu_custom_call.1} parent=5 // pred_check_branch
        %250 = sbr.rel (%p248) target = $region36
      $region35: #{tpu_custom_call.1} parent=5 // pred_region
        // Predicated region
        $region37: #{tpu_custom_call.1} parent=35 // pred_check
          %p251 = pneg %p52
        $region38: #{tpu_custom_call.1} parent=35 // pred_check_branch
          %253 = sbr.rel (%p251) target = $region40
        $region39: #{tpu_custom_call.1} parent=35 // pred_region
          %s254 = smul.u32 2, %s26
          %p255 = scmp.lt.s32.totalorder %s25, 1
          %s256 = scalar_select %p255, %s25, 1
          %p257 = scmp.lt.s32.totalorder %s254, 1
          %s258 = scalar_select %p257, %s254, 1
          %s259 = smul.addr %s256, 2
          %s260 = sadd.s32 %s258, %s259
          %s261 = smul.addr %s260, 4
          %s262 = scalar_lea.vmem %s0, %s261
          %s263 = smul.u32 2, %s26
        $region40: #{tpu_custom_call.1} parent=35 // pred_fallthru
          _
        // Predicated region
        $region41: #{tpu_custom_call.1} parent=35 // pred_check
          %p264 = pneg %p78
        $region42: #{tpu_custom_call.1} parent=35 // pred_check_branch
          %266 = sbr.rel (%p264) target = $region44
        $region43: #{tpu_custom_call.1} parent=35 // pred_region
          %p267 = scmp.lt.s32.totalorder %s25, 1
          %s268 = scalar_select %p267, %s25, 1
          %s269 = smul.addr %s268, 16
          %s270 = smul.addr %s269, 8
          %s271 = scalar_lea.vmem %s1, %s270
        $region44: #{tpu_custom_call.1} parent=35 // pred_fallthru
          _
      $region36: #{tpu_custom_call.1} parent=5 // pred_fallthru
        _
      %p272 = scmp.le.s32.totalorder 1, %s18
      %p273 = scmp.lt.s32.totalorder %s18, 3
      %p274 = pnand %p272, %p273
      %p275 = pneg %p274
      // Predicated region
      $region45: #{tpu_custom_call.1} parent=5 // pred_check
        _
      $region46: #{tpu_custom_call.1} parent=5 // pred_check_branch
        %277 = sbr.rel (%p274) target = $region48
      $region47: #{tpu_custom_call.1} parent=5 // pred_region
        %s278 = ssub.s32 %s18, 1
        %s279 = smul.u32 2, %s28
        %p280 = scmp.lt.s32.totalorder %s27, 1
        %s281 = scalar_select %p280, %s27, 1
        %p282 = scmp.lt.s32.totalorder %s279, 1
        %s283 = scalar_select %p282, %s279, 1
        %s284 = smul.addr %s281, 2
        %s285 = sadd.s32 %s283, %s284
        %s286 = smul.addr %s285, 4
        %s287 = scalar_lea.vmem %s0, %s286
        %p288 = pneg %p58
        %p289 = pneg %p55
        %p290 = scmp.lt.s32.totalorder %s27, 1
        %s291 = scalar_select %p290, %s27, 1
        %s292 = smul.addr %s291, 16
        %s293 = smul.addr %s292, 8
        %s294 = scalar_lea.vmem %s1, %s293
        %p295 = pneg %p84
        %p296 = pneg %p81
        %p297 = pneg %p105
        %p298 = pneg %p102
        %p299 = pneg %p126
        %p300 = pneg %p123
        %p301 = pneg %p147
        %p302 = pneg %p144
        %p303 = pneg %p168
        %p304 = pneg %p165
        %p305 = pneg %p189
        %p306 = pneg %p186
        %p307 = pneg %p217
        %p308 = pneg %p214
        %s309 = sand.u32 %s204, 1
        %s310 = scalar_lea.sflag [#allocation4], %s309
        %s311 = sand.u32 %s204, 1
        %s312 = smul.addr %s311, 2
        %s313 = scalar_lea.vmem [#allocation3], %s312
        %s314 = smul.u32 2, %s28
        %p315 = scmp.lt.s32.totalorder %s27, 1
        %s316 = scalar_select %p315, %s27, 1
        %p317 = scmp.lt.s32.totalorder %s314, 1
        %s318 = scalar_select %p317, %s314, 1
        %s319 = smul.addr %s316, 2
        %s320 = sadd.s32 %s318, %s319
        %s321 = smul.addr %s320, 4
        %s322 = scalar_lea.vmem %s0, %s321
        %s323 = smul.u32 2, %s28
        %p324 = scmp.lt.s32.totalorder %s27, 1
        %s325 = scalar_select %p324, %s27, 1
        %s326 = smul.addr %s325, 16
        %s327 = smul.addr %s326, 8
        %s328 = scalar_lea.vmem %s1, %s327
        %s329 = smul.u32 2, %s28
        %v331 = vld [vmem:[%s322] sm:$0x77]
        %v332 = vld [vmem:[%s328] sm:$0xff]
        %v333 = vld [vmem:[%s328 + $0x8] sm:$0xff]
        %v334 = vld [vmem:[%s328 + $0x10] sm:$0xff]
        %v335 = vld [vmem:[%s328 + $0x18] sm:$0xff]
        %v336 = vld [vmem:[%s328 + $0x20] sm:$0xff]
        %v337 = vld [vmem:[%s328 + $0x28] sm:$0xff]
        %v338 = vld [vmem:[%s328 + $0x30] sm:$0xff]
        %v339 = vld [vmem:[%s328 + $0x38] sm:$0xff]
        %v340 = vld [vmem:[%s328 + $0x40] sm:$0xff]
        %v341 = vld [vmem:[%s328 + $0x48] sm:$0xff]
        %v342 = vld [vmem:[%s328 + $0x50] sm:$0xff]
        %v343 = vld [vmem:[%s328 + $0x58] sm:$0xff]
        %v344 = vld [vmem:[%s328 + $0x60] sm:$0xff]
        %v345 = vld [vmem:[%s328 + $0x68] sm:$0xff]
        %v346 = vld [vmem:[%s328 + $0x70] sm:$0xff]
        %v347 = vld [vmem:[%s328 + $0x78] sm:$0xff]
        %v348 = vld [vmem:[%s2] sm:$0xff]
        %v349 = vld [vmem:[%s2 + $0x8] sm:$0xff]
        %v350 = vld [vmem:[%s2 + $0x10] sm:$0xff]
        %v351 = vld [vmem:[%s2 + $0x18] sm:$0xff]
        %v352 = vld [vmem:[%s2 + $0x20] sm:$0xff]
        %v353 = vld [vmem:[%s2 + $0x28] sm:$0xff]
        %v354 = vld [vmem:[%s2 + $0x30] sm:$0xff]
        %v355 = vld [vmem:[%s2 + $0x38] sm:$0xff]
        %v356 = vld [vmem:[%s2 + $0x40] sm:$0xff]
        %v357 = vld [vmem:[%s2 + $0x48] sm:$0xff]
        %v358 = vld [vmem:[%s2 + $0x50] sm:$0xff]
        %v359 = vld [vmem:[%s2 + $0x58] sm:$0xff]
        %v360 = vld [vmem:[%s2 + $0x60] sm:$0xff]
        %v361 = vld [vmem:[%s2 + $0x68] sm:$0xff]
        %v362 = vld [vmem:[%s2 + $0x70] sm:$0xff]
        %v363 = vld [vmem:[%s2 + $0x78] sm:$0xff]
        %365 = vset.pattern.permute.xlu0 0
        %366 = vperm.xlu0 %365, %v348
        %v367 = vpop.permute.xlu0 %366
        %370 = vset.pattern.permute.xlu0 0
        %371 = vperm.xlu0 %370, %v349
        %v372 = vpop.permute.xlu0 %371
        %375 = vset.pattern.permute.xlu0 0
        %376 = vperm.xlu0 %375, %v350
        %v377 = vpop.permute.xlu0 %376
        %380 = vset.pattern.permute.xlu0 0
        %381 = vperm.xlu0 %380, %v351
        %v382 = vpop.permute.xlu0 %381
        %385 = vset.pattern.permute.xlu0 0
        %386 = vperm.xlu0 %385, %v352
        %v387 = vpop.permute.xlu0 %386
        %390 = vset.pattern.permute.xlu0 0
        %391 = vperm.xlu0 %390, %v353
        %v392 = vpop.permute.xlu0 %391
        %395 = vset.pattern.permute.xlu0 0
        %396 = vperm.xlu0 %395, %v354
        %v397 = vpop.permute.xlu0 %396
        %400 = vset.pattern.permute.xlu0 0
        %401 = vperm.xlu0 %400, %v355
        %v402 = vpop.permute.xlu0 %401
        %405 = vset.pattern.permute.xlu0 0
        %406 = vperm.xlu0 %405, %v356
        %v407 = vpop.permute.xlu0 %406
        %410 = vset.pattern.permute.xlu0 0
        %411 = vperm.xlu0 %410, %v357
        %v412 = vpop.permute.xlu0 %411
        %415 = vset.pattern.permute.xlu0 0
        %416 = vperm.xlu0 %415, %v358
        %v417 = vpop.permute.xlu0 %416
        %420 = vset.pattern.permute.xlu0 0
        %421 = vperm.xlu0 %420, %v359
        %v422 = vpop.permute.xlu0 %421
        %425 = vset.pattern.permute.xlu0 0
        %426 = vperm.xlu0 %425, %v360
        %v427 = vpop.permute.xlu0 %426
        %430 = vset.pattern.permute.xlu0 0
        %431 = vperm.xlu0 %430, %v361
        %v432 = vpop.permute.xlu0 %431
        %435 = vset.pattern.permute.xlu0 0
        %436 = vperm.xlu0 %435, %v362
        %v437 = vpop.permute.xlu0 %436
        %440 = vset.pattern.permute.xlu0 0
        %441 = vperm.xlu0 %440, %v363
        %v442 = vpop.permute.xlu0 %441
        %v445 = vlaneseq
        %v446 = vshrl.u32 %v445, 7
        %v447 = vsub.s32 0, %v446
        %v448 = vrot.slane %v331, %v447
        %v449 = vlaneseq
        %v450 = vshrl.u32 %v449, 7
        %v451 = vsub.s32 4, %v450
        %v452 = vrot.slane %v331, %v451
        %v455 = vlaneseq
        %v456 = vshrl.u32 %v455, 7
        %v457 = vsub.s32 0, %v456
        %v458 = vrot.slane %v448, %v457
        %v459 = vlaneseq
        %v460 = vshrl.u32 %v459, 7
        %v461 = vsub.s32 0, %v460
        %v462 = vrot.slane %v452, %v461
        %v463 = vmul.f32 %v367, %v458
        %v464 = vmul.f32 %v367, %v462
        %v465 = vmul.f32 %v372, %v458
        %v466 = vmul.f32 %v372, %v462
        %v467 = vmul.f32 %v377, %v458
        %v468 = vmul.f32 %v377, %v462
        %v469 = vmul.f32 %v382, %v458
        %v470 = vmul.f32 %v382, %v462
        %v471 = vmul.f32 %v387, %v458
        %v472 = vmul.f32 %v387, %v462
        %v473 = vmul.f32 %v392, %v458
        %v474 = vmul.f32 %v392, %v462
        %v475 = vmul.f32 %v397, %v458
        %v476 = vmul.f32 %v397, %v462
        %v477 = vmul.f32 %v402, %v458
        %v478 = vmul.f32 %v402, %v462
        %v479 = vmul.f32 %v407, %v458
        %v480 = vmul.f32 %v407, %v462
        %v481 = vmul.f32 %v412, %v458
        %v482 = vmul.f32 %v412, %v462
        %v483 = vmul.f32 %v417, %v458
        %v484 = vmul.f32 %v417, %v462
        %v485 = vmul.f32 %v422, %v458
        %v486 = vmul.f32 %v422, %v462
        %v487 = vmul.f32 %v427, %v458
        %v488 = vmul.f32 %v427, %v462
        %v489 = vmul.f32 %v432, %v458
        %v490 = vmul.f32 %v432, %v462
        %v491 = vmul.f32 %v437, %v458
        %v492 = vmul.f32 %v437, %v462
        %v493 = vmul.f32 %v442, %v458
        %v494 = vmul.f32 %v442, %v462
        %496 = vset.pattern.permute.xlu0 0
        %497 = vperm.xlu0 %496, %v332
        %v498 = vpop.permute.xlu0 %497
        %501 = vset.pattern.permute.xlu0 0
        %502 = vperm.xlu0 %501, %v333
        %v503 = vpop.permute.xlu0 %502
        %506 = vset.pattern.permute.xlu0 0
        %507 = vperm.xlu0 %506, %v334
        %v508 = vpop.permute.xlu0 %507
        %511 = vset.pattern.permute.xlu0 0
        %512 = vperm.xlu0 %511, %v335
        %v513 = vpop.permute.xlu0 %512
        %516 = vset.pattern.permute.xlu0 0
        %517 = vperm.xlu0 %516, %v336
        %v518 = vpop.permute.xlu0 %517
        %521 = vset.pattern.permute.xlu0 0
        %522 = vperm.xlu0 %521, %v337
        %v523 = vpop.permute.xlu0 %522
        %526 = vset.pattern.permute.xlu0 0
        %527 = vperm.xlu0 %526, %v338
        %v528 = vpop.permute.xlu0 %527
        %531 = vset.pattern.permute.xlu0 0
        %532 = vperm.xlu0 %531, %v339
        %v533 = vpop.permute.xlu0 %532
        %536 = vset.pattern.permute.xlu0 0
        %537 = vperm.xlu0 %536, %v340
        %v538 = vpop.permute.xlu0 %537
        %541 = vset.pattern.permute.xlu0 0
        %542 = vperm.xlu0 %541, %v341
        %v543 = vpop.permute.xlu0 %542
        %546 = vset.pattern.permute.xlu0 0
        %547 = vperm.xlu0 %546, %v342
        %v548 = vpop.permute.xlu0 %547
        %551 = vset.pattern.permute.xlu0 0
        %552 = vperm.xlu0 %551, %v343
        %v553 = vpop.permute.xlu0 %552
        %556 = vset.pattern.permute.xlu0 0
        %557 = vperm.xlu0 %556, %v344
        %v558 = vpop.permute.xlu0 %557
        %561 = vset.pattern.permute.xlu0 0
        %562 = vperm.xlu0 %561, %v345
        %v563 = vpop.permute.xlu0 %562
        %566 = vset.pattern.permute.xlu0 0
        %567 = vperm.xlu0 %566, %v346
        %v568 = vpop.permute.xlu0 %567
        %571 = vset.pattern.permute.xlu0 0
        %572 = vperm.xlu0 %571, %v347
        %v573 = vpop.permute.xlu0 %572
        %v575 = vadd.f32 %v498, %v463
        %v576 = vadd.f32 %v498, %v464
        %v577 = vadd.f32 %v503, %v465
        %v578 = vadd.f32 %v503, %v466
        %v579 = vadd.f32 %v508, %v467
        %v580 = vadd.f32 %v508, %v468
        %v581 = vadd.f32 %v513, %v469
        %v582 = vadd.f32 %v513, %v470
        %v583 = vadd.f32 %v518, %v471
        %v584 = vadd.f32 %v518, %v472
        %v585 = vadd.f32 %v523, %v473
        %v586 = vadd.f32 %v523, %v474
        %v587 = vadd.f32 %v528, %v475
        %v588 = vadd.f32 %v528, %v476
        %v589 = vadd.f32 %v533, %v477
        %v590 = vadd.f32 %v533, %v478
        %v591 = vadd.f32 %v538, %v479
        %v592 = vadd.f32 %v538, %v480
        %v593 = vadd.f32 %v543, %v481
        %v594 = vadd.f32 %v543, %v482
        %v595 = vadd.f32 %v548, %v483
        %v596 = vadd.f32 %v548, %v484
        %v597 = vadd.f32 %v553, %v485
        %v598 = vadd.f32 %v553, %v486
        %v599 = vadd.f32 %v558, %v487
        %v600 = vadd.f32 %v558, %v488
        %v601 = vadd.f32 %v563, %v489
        %v602 = vadd.f32 %v563, %v490
        %v603 = vadd.f32 %v568, %v491
        %v604 = vadd.f32 %v568, %v492
        %v605 = vadd.f32 %v573, %v493
        %v606 = vadd.f32 %v573, %v494
        %s607 = scalar_lea.vmem %s2, 128
        %v608 = vld [vmem:[%s607] sm:$0xff]
        %v609 = vld [vmem:[%s607 + $0x8] sm:$0xff]
        %v610 = vld [vmem:[%s607 + $0x10] sm:$0xff]
        %v611 = vld [vmem:[%s607 + $0x18] sm:$0xff]
        %v612 = vld [vmem:[%s607 + $0x20] sm:$0xff]
        %v613 = vld [vmem:[%s607 + $0x28] sm:$0xff]
        %v614 = vld [vmem:[%s607 + $0x30] sm:$0xff]
        %v615 = vld [vmem:[%s607 + $0x38] sm:$0xff]
        %v616 = vld [vmem:[%s607 + $0x40] sm:$0xff]
        %v617 = vld [vmem:[%s607 + $0x48] sm:$0xff]
        %v618 = vld [vmem:[%s607 + $0x50] sm:$0xff]
        %v619 = vld [vmem:[%s607 + $0x58] sm:$0xff]
        %v620 = vld [vmem:[%s607 + $0x60] sm:$0xff]
        %v621 = vld [vmem:[%s607 + $0x68] sm:$0xff]
        %v622 = vld [vmem:[%s607 + $0x70] sm:$0xff]
        %v623 = vld [vmem:[%s607 + $0x78] sm:$0xff]
        %625 = vset.pattern.permute.xlu0 0
        %626 = vperm.xlu0 %625, %v608
        %v627 = vpop.permute.xlu0 %626
        %630 = vset.pattern.permute.xlu0 0
        %631 = vperm.xlu0 %630, %v609
        %v632 = vpop.permute.xlu0 %631
        %635 = vset.pattern.permute.xlu0 0
        %636 = vperm.xlu0 %635, %v610
        %v637 = vpop.permute.xlu0 %636
        %640 = vset.pattern.permute.xlu0 0
        %641 = vperm.xlu0 %640, %v611
        %v642 = vpop.permute.xlu0 %641
        %645 = vset.pattern.permute.xlu0 0
        %646 = vperm.xlu0 %645, %v612
        %v647 = vpop.permute.xlu0 %646
        %650 = vset.pattern.permute.xlu0 0
        %651 = vperm.xlu0 %650, %v613
        %v652 = vpop.permute.xlu0 %651
        %655 = vset.pattern.permute.xlu0 0
        %656 = vperm.xlu0 %655, %v614
        %v657 = vpop.permute.xlu0 %656
        %660 = vset.pattern.permute.xlu0 0
        %661 = vperm.xlu0 %660, %v615
        %v662 = vpop.permute.xlu0 %661
        %665 = vset.pattern.permute.xlu0 0
        %666 = vperm.xlu0 %665, %v616
        %v667 = vpop.permute.xlu0 %666
        %670 = vset.pattern.permute.xlu0 0
        %671 = vperm.xlu0 %670, %v617
        %v672 = vpop.permute.xlu0 %671
        %675 = vset.pattern.permute.xlu0 0
        %676 = vperm.xlu0 %675, %v618
        %v677 = vpop.permute.xlu0 %676
        %680 = vset.pattern.permute.xlu0 0
        %681 = vperm.xlu0 %680, %v619
        %v682 = vpop.permute.xlu0 %681
        %685 = vset.pattern.permute.xlu0 0
        %686 = vperm.xlu0 %685, %v620
        %v687 = vpop.permute.xlu0 %686
        %690 = vset.pattern.permute.xlu0 0
        %691 = vperm.xlu0 %690, %v621
        %v692 = vpop.permute.xlu0 %691
        %695 = vset.pattern.permute.xlu0 0
        %696 = vperm.xlu0 %695, %v622
        %v697 = vpop.permute.xlu0 %696
        %700 = vset.pattern.permute.xlu0 0
        %701 = vperm.xlu0 %700, %v623
        %v702 = vpop.permute.xlu0 %701
        %v704 = vlaneseq
        %v705 = vshrl.u32 %v704, 7
        %v706 = vsub.s32 1, %v705
        %v707 = vrot.slane %v331, %v706
        %v708 = vlaneseq
        %v709 = vshrl.u32 %v708, 7
        %v710 = vsub.s32 5, %v709
        %v711 = vrot.slane %v331, %v710
        %v714 = vlaneseq
        %v715 = vshrl.u32 %v714, 7
        %v716 = vsub.s32 1, %v715
        %v717 = vrot.slane %v707, %v716
        %v718 = vlaneseq
        %v719 = vshrl.u32 %v718, 7
        %v720 = vsub.s32 1, %v719
        %v721 = vrot.slane %v711, %v720
        %v722 = vmul.f32 %v627, %v717
        %v723 = vmul.f32 %v627, %v721
        %v724 = vmul.f32 %v632, %v717
        %v725 = vmul.f32 %v632, %v721
        %v726 = vmul.f32 %v637, %v717
        %v727 = vmul.f32 %v637, %v721
        %v728 = vmul.f32 %v642, %v717
        %v729 = vmul.f32 %v642, %v721
        %v730 = vmul.f32 %v647, %v717
        %v731 = vmul.f32 %v647, %v721
        %v732 = vmul.f32 %v652, %v717
        %v733 = vmul.f32 %v652, %v721
        %v734 = vmul.f32 %v657, %v717
        %v735 = vmul.f32 %v657, %v721
        %v736 = vmul.f32 %v662, %v717
        %v737 = vmul.f32 %v662, %v721
        %v738 = vmul.f32 %v667, %v717
        %v739 = vmul.f32 %v667, %v721
        %v740 = vmul.f32 %v672, %v717
        %v741 = vmul.f32 %v672, %v721
        %v742 = vmul.f32 %v677, %v717
        %v743 = vmul.f32 %v677, %v721
        %v744 = vmul.f32 %v682, %v717
        %v745 = vmul.f32 %v682, %v721
        %v746 = vmul.f32 %v687, %v717
        %v747 = vmul.f32 %v687, %v721
        %v748 = vmul.f32 %v692, %v717
        %v749 = vmul.f32 %v692, %v721
        %v750 = vmul.f32 %v697, %v717
        %v751 = vmul.f32 %v697, %v721
        %v752 = vmul.f32 %v702, %v717
        %v753 = vmul.f32 %v702, %v721
        %v754 = vadd.f32 %v575, %v722
        %v755 = vadd.f32 %v576, %v723
        %v756 = vadd.f32 %v577, %v724
        %v757 = vadd.f32 %v578, %v725
        %v758 = vadd.f32 %v579, %v726
        %v759 = vadd.f32 %v580, %v727
        %v760 = vadd.f32 %v581, %v728
        %v761 = vadd.f32 %v582, %v729
        %v762 = vadd.f32 %v583, %v730
        %v763 = vadd.f32 %v584, %v731
        %v764 = vadd.f32 %v585, %v732
        %v765 = vadd.f32 %v586, %v733
        %v766 = vadd.f32 %v587, %v734
        %v767 = vadd.f32 %v588, %v735
        %v768 = vadd.f32 %v589, %v736
        %v769 = vadd.f32 %v590, %v737
        %v770 = vadd.f32 %v591, %v738
        %v771 = vadd.f32 %v592, %v739
        %v772 = vadd.f32 %v593, %v740
        %v773 = vadd.f32 %v594, %v741
        %v774 = vadd.f32 %v595, %v742
        %v775 = vadd.f32 %v596, %v743
        %v776 = vadd.f32 %v597, %v744
        %v777 = vadd.f32 %v598, %v745
        %v778 = vadd.f32 %v599, %v746
        %v779 = vadd.f32 %v600, %v747
        %v780 = vadd.f32 %v601, %v748
        %v781 = vadd.f32 %v602, %v749
        %v782 = vadd.f32 %v603, %v750
        %v783 = vadd.f32 %v604, %v751
        %v784 = vadd.f32 %v605, %v752
        %v785 = vadd.f32 %v606, %v753
        %s786 = scalar_lea.vmem %s2, 256
        %v787 = vld [vmem:[%s786] sm:$0xff]
        %v788 = vld [vmem:[%s786 + $0x8] sm:$0xff]
        %v789 = vld [vmem:[%s786 + $0x10] sm:$0xff]
        %v790 = vld [vmem:[%s786 + $0x18] sm:$0xff]
        %v791 = vld [vmem:[%s786 + $0x20] sm:$0xff]
        %v792 = vld [vmem:[%s786 + $0x28] sm:$0xff]
        %v793 = vld [vmem:[%s786 + $0x30] sm:$0xff]
        %v794 = vld [vmem:[%s786 + $0x38] sm:$0xff]
        %v795 = vld [vmem:[%s786 + $0x40] sm:$0xff]
        %v796 = vld [vmem:[%s786 + $0x48] sm:$0xff]
        %v797 = vld [vmem:[%s786 + $0x50] sm:$0xff]
        %v798 = vld [vmem:[%s786 + $0x58] sm:$0xff]
        %v799 = vld [vmem:[%s786 + $0x60] sm:$0xff]
        %v800 = vld [vmem:[%s786 + $0x68] sm:$0xff]
        %v801 = vld [vmem:[%s786 + $0x70] sm:$0xff]
        %v802 = vld [vmem:[%s786 + $0x78] sm:$0xff]
        %804 = vset.pattern.permute.xlu0 0
        %805 = vperm.xlu0 %804, %v787
        %v806 = vpop.permute.xlu0 %805
        %809 = vset.pattern.permute.xlu0 0
        %810 = vperm.xlu0 %809, %v788
        %v811 = vpop.permute.xlu0 %810
        %814 = vset.pattern.permute.xlu0 0
        %815 = vperm.xlu0 %814, %v789
        %v816 = vpop.permute.xlu0 %815
        %819 = vset.pattern.permute.xlu0 0
        %820 = vperm.xlu0 %819, %v790
        %v821 = vpop.permute.xlu0 %820
        %824 = vset.pattern.permute.xlu0 0
        %825 = vperm.xlu0 %824, %v791
        %v826 = vpop.permute.xlu0 %825
        %829 = vset.pattern.permute.xlu0 0
        %830 = vperm.xlu0 %829, %v792
        %v831 = vpop.permute.xlu0 %830
        %834 = vset.pattern.permute.xlu0 0
        %835 = vperm.xlu0 %834, %v793
        %v836 = vpop.permute.xlu0 %835
        %839 = vset.pattern.permute.xlu0 0
        %840 = vperm.xlu0 %839, %v794
        %v841 = vpop.permute.xlu0 %840
        %844 = vset.pattern.permute.xlu0 0
        %845 = vperm.xlu0 %844, %v795
        %v846 = vpop.permute.xlu0 %845
        %849 = vset.pattern.permute.xlu0 0
        %850 = vperm.xlu0 %849, %v796
        %v851 = vpop.permute.xlu0 %850
        %854 = vset.pattern.permute.xlu0 0
        %855 = vperm.xlu0 %854, %v797
        %v856 = vpop.permute.xlu0 %855
        %859 = vset.pattern.permute.xlu0 0
        %860 = vperm.xlu0 %859, %v798
        %v861 = vpop.permute.xlu0 %860
        %864 = vset.pattern.permute.xlu0 0
        %865 = vperm.xlu0 %864, %v799
        %v866 = vpop.permute.xlu0 %865
        %869 = vset.pattern.permute.xlu0 0
        %870 = vperm.xlu0 %869, %v800
        %v871 = vpop.permute.xlu0 %870
        %874 = vset.pattern.permute.xlu0 0
        %875 = vperm.xlu0 %874, %v801
        %v876 = vpop.permute.xlu0 %875
        %879 = vset.pattern.permute.xlu0 0
        %880 = vperm.xlu0 %879, %v802
        %v881 = vpop.permute.xlu0 %880
        %v883 = vlaneseq
        %v884 = vshrl.u32 %v883, 7
        %v885 = vsub.s32 2, %v884
        %v886 = vrot.slane %v331, %v885
        %v887 = vlaneseq
        %v888 = vshrl.u32 %v887, 7
        %v889 = vsub.s32 6, %v888
        %v890 = vrot.slane %v331, %v889
        %v893 = vlaneseq
        %v894 = vshrl.u32 %v893, 7
        %v895 = vsub.s32 2, %v894
        %v896 = vrot.slane %v886, %v895
        %v897 = vlaneseq
        %v898 = vshrl.u32 %v897, 7
        %v899 = vsub.s32 2, %v898
        %v900 = vrot.slane %v890, %v899
        %v901 = vmul.f32 %v806, %v896
        %v902 = vmul.f32 %v806, %v900
        %v903 = vmul.f32 %v811, %v896
        %v904 = vmul.f32 %v811, %v900
        %v905 = vmul.f32 %v816, %v896
        %v906 = vmul.f32 %v816, %v900
        %v907 = vmul.f32 %v821, %v896
        %v908 = vmul.f32 %v821, %v900
        %v909 = vmul.f32 %v826, %v896
        %v910 = vmul.f32 %v826, %v900
        %v911 = vmul.f32 %v831, %v896
        %v912 = vmul.f32 %v831, %v900
        %v913 = vmul.f32 %v836, %v896
        %v914 = vmul.f32 %v836, %v900
        %v915 = vmul.f32 %v841, %v896
        %v916 = vmul.f32 %v841, %v900
        %v917 = vmul.f32 %v846, %v896
        %v918 = vmul.f32 %v846, %v900
        %v919 = vmul.f32 %v851, %v896
        %v920 = vmul.f32 %v851, %v900
        %v921 = vmul.f32 %v856, %v896
        %v922 = vmul.f32 %v856, %v900
        %v923 = vmul.f32 %v861, %v896
        %v924 = vmul.f32 %v861, %v900
        %v925 = vmul.f32 %v866, %v896
        %v926 = vmul.f32 %v866, %v900
        %v927 = vmul.f32 %v871, %v896
        %v928 = vmul.f32 %v871, %v900
        %v929 = vmul.f32 %v876, %v896
        %v930 = vmul.f32 %v876, %v900
        %v931 = vmul.f32 %v881, %v896
        %v932 = vmul.f32 %v881, %v900
        %v933 = vadd.f32 %v754, %v901
        %v934 = vadd.f32 %v755, %v902
        %v935 = vadd.f32 %v756, %v903
        %v936 = vadd.f32 %v757, %v904
        %v937 = vadd.f32 %v758, %v905
        %v938 = vadd.f32 %v759, %v906
        %v939 = vadd.f32 %v760, %v907
        %v940 = vadd.f32 %v761, %v908
        %v941 = vadd.f32 %v762, %v909
        %v942 = vadd.f32 %v763, %v910
        %v943 = vadd.f32 %v764, %v911
        %v944 = vadd.f32 %v765, %v912
        %v945 = vadd.f32 %v766, %v913
        %v946 = vadd.f32 %v767, %v914
        %v947 = vadd.f32 %v768, %v915
        %v948 = vadd.f32 %v769, %v916
        %v949 = vadd.f32 %v770, %v917
        %v950 = vadd.f32 %v771, %v918
        %v951 = vadd.f32 %v772, %v919
        %v952 = vadd.f32 %v773, %v920
        %v953 = vadd.f32 %v774, %v921
        %v954 = vadd.f32 %v775, %v922
        %v955 = vadd.f32 %v776, %v923
        %v956 = vadd.f32 %v777, %v924
        %v957 = vadd.f32 %v778, %v925
        %v958 = vadd.f32 %v779, %v926
        %v959 = vadd.f32 %v780, %v927
        %v960 = vadd.f32 %v781, %v928
        %v961 = vadd.f32 %v782, %v929
        %v962 = vadd.f32 %v783, %v930
        %v963 = vadd.f32 %v784, %v931
        %v964 = vadd.f32 %v785, %v932
        %v965 = vtanh.pop %v933
        %v966 = vtanh.pop %v934
        %v967 = vtanh.pop %v935
        %v968 = vtanh.pop %v936
        %v969 = vtanh.pop %v937
        %v970 = vtanh.pop %v938
        %v971 = vtanh.pop %v939
        %v972 = vtanh.pop %v940
        %v973 = vtanh.pop %v941
        %v974 = vtanh.pop %v942
        %v975 = vtanh.pop %v943
        %v976 = vtanh.pop %v944
        %v977 = vtanh.pop %v945
        %v978 = vtanh.pop %v946
        %v979 = vtanh.pop %v947
        %v980 = vtanh.pop %v948
        %v981 = vtanh.pop %v949
        %v982 = vtanh.pop %v950
        %v983 = vtanh.pop %v951
        %v984 = vtanh.pop %v952
        %v985 = vtanh.pop %v953
        %v986 = vtanh.pop %v954
        %v987 = vtanh.pop %v955
        %v988 = vtanh.pop %v956
        %v989 = vtanh.pop %v957
        %v990 = vtanh.pop %v958
        %v991 = vtanh.pop %v959
        %v992 = vtanh.pop %v960
        %v993 = vtanh.pop %v961
        %v994 = vtanh.pop %v962
        %v995 = vtanh.pop %v963
        %v996 = vtanh.pop %v964
        %v997 = vld [vmem:[%s3] sm:$0xf]
        %v998 = vld [vmem:[%s3 + $0x4] sm:$0xf]
        %v999 = vld [vmem:[%s3 + $0x8] sm:$0xf]
        %v1000 = vld [vmem:[%s3 + $0xc] sm:$0xf]
        %v1001 = vld [vmem:[%s3 + $0x10] sm:$0xf]
        %v1002 = vld [vmem:[%s3 + $0x14] sm:$0xf]
        %v1003 = vld [vmem:[%s3 + $0x18] sm:$0xf]
        %v1004 = vld [vmem:[%s3 + $0x1c] sm:$0xf]
        %v1005 = vld [vmem:[%s3 + $0x20] sm:$0xf]
        %v1006 = vld [vmem:[%s3 + $0x24] sm:$0xf]
        %v1007 = vld [vmem:[%s3 + $0x28] sm:$0xf]
        %v1008 = vld [vmem:[%s3 + $0x2c] sm:$0xf]
        %v1009 = vld [vmem:[%s3 + $0x30] sm:$0xf]
        %v1010 = vld [vmem:[%s3 + $0x34] sm:$0xf]
        %v1011 = vld [vmem:[%s3 + $0x38] sm:$0xf]
        %v1012 = vld [vmem:[%s3 + $0x3c] sm:$0xf]
        %v1013 = vpack.c.bf16 %v967, %v965
        %v1014 = vpack.c.bf16 %v968, %v966
        %v1015 = vpack.c.bf16 %v971, %v969
        %v1016 = vpack.c.bf16 %v972, %v970
        %v1017 = vpack.c.bf16 %v975, %v973
        %v1018 = vpack.c.bf16 %v976, %v974
        %v1019 = vpack.c.bf16 %v979, %v977
        %v1020 = vpack.c.bf16 %v980, %v978
        %v1021 = vpack.c.bf16 %v983, %v981
        %v1022 = vpack.c.bf16 %v984, %v982
        %v1023 = vpack.c.bf16 %v987, %v985
        %v1024 = vpack.c.bf16 %v988, %v986
        %v1025 = vpack.c.bf16 %v991, %v989
        %v1026 = vpack.c.bf16 %v992, %v990
        %v1027 = vpack.c.bf16 %v995, %v993
        %v1028 = vpack.c.bf16 %v996, %v994
        %v1029 = vld [vmem:[%s4] sm:$0xff]
        %v1030 = vld [vmem:[%s4 + $0x8] sm:$0xff]
        %v1031 = vld [vmem:[%s4 + $0x10] sm:$0xff]
        %v1032 = vld [vmem:[%s4 + $0x18] sm:$0xff]
        %v1033 = vld [vmem:[%s4 + $0x20] sm:$0xff]
        %v1034 = vld [vmem:[%s4 + $0x28] sm:$0xff]
        %v1035 = vld [vmem:[%s4 + $0x30] sm:$0xff]
        %v1036 = vld [vmem:[%s4 + $0x38] sm:$0xff]
        %v1037 = vld [vmem:[%s4 + $0x40] sm:$0xff]
        %v1038 = vld [vmem:[%s4 + $0x48] sm:$0xff]
        %v1039 = vld [vmem:[%s4 + $0x50] sm:$0xff]
        %v1040 = vld [vmem:[%s4 + $0x58] sm:$0xff]
        %v1041 = vld [vmem:[%s4 + $0x60] sm:$0xff]
        %v1042 = vld [vmem:[%s4 + $0x68] sm:$0xff]
        %v1043 = vld [vmem:[%s4 + $0x70] sm:$0xff]
        %v1044 = vld [vmem:[%s4 + $0x78] sm:$0xff]
        %1046 = vset.pattern.permute.xlu0 0
        %1047 = vperm.xlu0 %1046, %v1029
        %v1048 = vpop.permute.xlu0 %1047
        %1051 = vset.pattern.permute.xlu0 0
        %1052 = vperm.xlu0 %1051, %v1030
        %v1053 = vpop.permute.xlu0 %1052
        %1056 = vset.pattern.permute.xlu0 0
        %1057 = vperm.xlu0 %1056, %v1031
        %v1058 = vpop.permute.xlu0 %1057
        %1061 = vset.pattern.permute.xlu0 0
        %1062 = vperm.xlu0 %1061, %v1032
        %v1063 = vpop.permute.xlu0 %1062
        %1066 = vset.pattern.permute.xlu0 0
        %1067 = vperm.xlu0 %1066, %v1033
        %v1068 = vpop.permute.xlu0 %1067
        %1071 = vset.pattern.permute.xlu0 0
        %1072 = vperm.xlu0 %1071, %v1034
        %v1073 = vpop.permute.xlu0 %1072
        %1076 = vset.pattern.permute.xlu0 0
        %1077 = vperm.xlu0 %1076, %v1035
        %v1078 = vpop.permute.xlu0 %1077
        %1081 = vset.pattern.permute.xlu0 0
        %1082 = vperm.xlu0 %1081, %v1036
        %v1083 = vpop.permute.xlu0 %1082
        %1086 = vset.pattern.permute.xlu0 0
        %1087 = vperm.xlu0 %1086, %v1037
        %v1088 = vpop.permute.xlu0 %1087
        %1091 = vset.pattern.permute.xlu0 0
        %1092 = vperm.xlu0 %1091, %v1038
        %v1093 = vpop.permute.xlu0 %1092
        %1096 = vset.pattern.permute.xlu0 0
        %1097 = vperm.xlu0 %1096, %v1039
        %v1098 = vpop.permute.xlu0 %1097
        %1101 = vset.pattern.permute.xlu0 0
        %1102 = vperm.xlu0 %1101, %v1040
        %v1103 = vpop.permute.xlu0 %1102
        %1106 = vset.pattern.permute.xlu0 0
        %1107 = vperm.xlu0 %1106, %v1041
        %v1108 = vpop.permute.xlu0 %1107
        %1111 = vset.pattern.permute.xlu0 0
        %1112 = vperm.xlu0 %1111, %v1042
        %v1113 = vpop.permute.xlu0 %1112
        %1116 = vset.pattern.permute.xlu0 0
        %1117 = vperm.xlu0 %1116, %v1043
        %v1118 = vpop.permute.xlu0 %1117
        %1121 = vset.pattern.permute.xlu0 0
        %1122 = vperm.xlu0 %1121, %v1044
        %v1123 = vpop.permute.xlu0 %1122
        %v1141 = vunpack.c.l.b16 %v997
        %v1142 = vunpack.c.l.b16 %v998
        %v1143 = vunpack.c.l.b16 %v999
        %v1144 = vunpack.c.l.b16 %v1000
        %v1145 = vunpack.c.l.b16 %v1001
        %v1146 = vunpack.c.l.b16 %v1002
        %v1147 = vunpack.c.l.b16 %v1003
        %v1148 = vunpack.c.l.b16 %v1004
        %v1149 = vunpack.c.l.b16 %v1005
        %v1150 = vunpack.c.l.b16 %v1006
        %v1151 = vunpack.c.l.b16 %v1007
        %v1152 = vunpack.c.l.b16 %v1008
        %v1153 = vunpack.c.l.b16 %v1009
        %v1154 = vunpack.c.l.b16 %v1010
        %v1155 = vunpack.c.l.b16 %v1011
        %v1156 = vunpack.c.l.b16 %v1012
        %v1157 = vpack.c.b16 %v1142, %v1141
        %v1158 = vpack.c.b16 %v1144, %v1143
        %v1159 = vpack.c.b16 %v1146, %v1145
        %v1160 = vpack.c.b16 %v1148, %v1147
        %v1161 = vpack.c.b16 %v1150, %v1149
        %v1162 = vpack.c.b16 %v1152, %v1151
        %v1163 = vpack.c.b16 %v1154, %v1153
        %v1164 = vpack.c.b16 %v1156, %v1155
        %1173 = vmatprep.subr.bf16.mxu0 %v1014
        %1174 = vmatpush1.bf16.msra.mxu0 %v1013
        %1175 = vmatprep.subr.bf16.mxu0 %v1016
        %1176 = vmatpush1.bf16.msra.mxu0 %v1015
        %1177 = vmatprep.subr.bf16.mxu0 %v1018
        %1178 = vmatpush1.bf16.msra.mxu0 %v1017
        %1179 = vmatprep.subr.bf16.mxu0 %v1020
        %1180 = vmatpush1.bf16.msra.mxu0 %v1019
        %1181 = vmatprep.subr.bf16.mxu0 %v1022
        %1182 = vmatpush1.bf16.msra.mxu0 %v1021
        %1183 = vmatprep.subr.bf16.mxu0 %v1024
        %1184 = vmatpush1.bf16.msra.mxu0 %v1023
        %1185 = vmatprep.subr.bf16.mxu0 %v1026
        %1186 = vmatpush1.bf16.msra.mxu0 %v1025
        %1187 = vmatprep.subr.bf16.mxu0 %v1028
        %1188 = vmatpush1.bf16.msra.mxu0 %v1027
        %1189 = vmatprep.subr.bf16.mxu0 0
        %1190 = vmatpush1.bf16.msra.mxu0 0
        %1191 = vmatprep.subr.bf16.mxu0 0
        %1192 = vmatpush1.bf16.msra.mxu0 0
        %1193 = vmatprep.subr.bf16.mxu0 0
        %1194 = vmatpush1.bf16.msra.mxu0 0
        %1195 = vmatprep.subr.bf16.mxu0 0
        %1196 = vmatpush1.bf16.msra.mxu0 0
        %1197 = vmatprep.subr.bf16.mxu0 0
        %1198 = vmatpush1.bf16.msra.mxu0 0
        %1199 = vmatprep.subr.bf16.mxu0 0
        %1200 = vmatpush1.bf16.msra.mxu0 0
        %1201 = vmatprep.subr.bf16.mxu0 0
        %1202 = vmatpush1.bf16.msra.mxu0 0
        %1203 = vmatprep.subr.bf16.mxu0 0
        %1204 = vmatpush1.bf16.msra.mxu0 0
        %1205 = vmatprep.mubr.bf16.mxu0 0
        %1206 = vmatmul.mubr.bf16.gmra.mrb[0].mxu0 %v1157
        %v1207 = vpop.f32.mrb[0].mxu0
        %v1208 = vadd.f32 %v1048, %v1207
        %v1209 = vpop.f32.mrb[0].mxu0
        %v1210 = vadd.f32 %v1048, %v1209
        %v1211 = vpop.f32.mrb[0].mxu0
        %v1212 = vadd.f32 %v1053, %v1211
        %v1213 = vpop.f32.mrb[0].mxu0
        %v1214 = vadd.f32 %v1053, %v1213
        %1215 = vmatprep.mubr.bf16.mxu0 0
        %1216 = vmatmul.mubr.bf16.gmra.mrb[0].mxu0 %v1158
        %v1217 = vpop.f32.mrb[0].mxu0
        %v1218 = vadd.f32 %v1058, %v1217
        %v1219 = vpop.f32.mrb[0].mxu0
        %v1220 = vadd.f32 %v1058, %v1219
        %v1221 = vpop.f32.mrb[0].mxu0
        %v1222 = vadd.f32 %v1063, %v1221
        %v1223 = vpop.f32.mrb[0].mxu0
        %v1224 = vadd.f32 %v1063, %v1223
        %1225 = vmatprep.mubr.bf16.mxu0 0
        %1226 = vmatmul.mubr.bf16.gmra.mrb[0].mxu0 %v1159
        %v1227 = vpop.f32.mrb[0].mxu0
        %v1228 = vadd.f32 %v1068, %v1227
        %v1229 = vpop.f32.mrb[0].mxu0
        %v1230 = vadd.f32 %v1068, %v1229
        %v1231 = vpop.f32.mrb[0].mxu0
        %v1232 = vadd.f32 %v1073, %v1231
        %v1233 = vpop.f32.mrb[0].mxu0
        %v1234 = vadd.f32 %v1073, %v1233
        %1235 = vmatprep.mubr.bf16.mxu0 0
        %1236 = vmatmul.mubr.bf16.gmra.mrb[0].mxu0 %v1160
        %v1237 = vpop.f32.mrb[0].mxu0
        %v1238 = vadd.f32 %v1078, %v1237
        %v1239 = vpop.f32.mrb[0].mxu0
        %v1240 = vadd.f32 %v1078, %v1239
        %v1241 = vpop.f32.mrb[0].mxu0
        %v1242 = vadd.f32 %v1083, %v1241
        %v1243 = vpop.f32.mrb[0].mxu0
        %v1244 = vadd.f32 %v1083, %v1243
        %1245 = vmatprep.mubr.bf16.mxu0 0
        %1246 = vmatmul.mubr.bf16.gmra.mrb[0].mxu0 %v1161
        %v1247 = vpop.f32.mrb[0].mxu0
        %v1248 = vadd.f32 %v1088, %v1247
        %v1249 = vpop.f32.mrb[0].mxu0
        %v1250 = vadd.f32 %v1088, %v1249
        %v1251 = vpop.f32.mrb[0].mxu0
        %v1252 = vadd.f32 %v1093, %v1251
        %v1253 = vpop.f32.mrb[0].mxu0
        %v1254 = vadd.f32 %v1093, %v1253
        %1255 = vmatprep.mubr.bf16.mxu0 0
        %1256 = vmatmul.mubr.bf16.gmra.mrb[0].mxu0 %v1162
        %v1257 = vpop.f32.mrb[0].mxu0
        %v1258 = vadd.f32 %v1098, %v1257
        %v1259 = vpop.f32.mrb[0].mxu0
        %v1260 = vadd.f32 %v1098, %v1259
        %v1261 = vpop.f32.mrb[0].mxu0
        %v1262 = vadd.f32 %v1103, %v1261
        %v1263 = vpop.f32.mrb[0].mxu0
        %v1264 = vadd.f32 %v1103, %v1263
        %1265 = vmatprep.mubr.bf16.mxu0 0
        %1266 = vmatmul.mubr.bf16.gmra.mrb[0].mxu0 %v1163
        %v1267 = vpop.f32.mrb[0].mxu0
        %v1268 = vadd.f32 %v1108, %v1267
        %v1269 = vpop.f32.mrb[0].mxu0
        %v1270 = vadd.f32 %v1108, %v1269
        %v1271 = vpop.f32.mrb[0].mxu0
        %v1272 = vadd.f32 %v1113, %v1271
        %v1273 = vpop.f32.mrb[0].mxu0
        %v1274 = vadd.f32 %v1113, %v1273
        %1275 = vmatprep.mubr.bf16.mxu0 0
        %1276 = vmatmul.mubr.bf16.gmra.mrb[0].mxu0 %v1164
        %v1277 = vpop.f32.mrb[0].mxu0
        %v1278 = vadd.f32 %v1118, %v1277
        %v1279 = vpop.f32.mrb[0].mxu0
        %v1280 = vadd.f32 %v1118, %v1279
        %v1281 = vpop.f32.mrb[0].mxu0
        %v1282 = vadd.f32 %v1123, %v1281
        %v1283 = vpop.f32.mrb[0].mxu0
        %v1284 = vadd.f32 %v1123, %v1283
        %1285 = vdwg.mxu0
        %v1286 = vtanh.pop %v1208
        %v1287 = vtanh.pop %v1210
        %v1288 = vtanh.pop %v1212
        %v1289 = vtanh.pop %v1214
        %v1290 = vtanh.pop %v1218
        %v1291 = vtanh.pop %v1220
        %v1292 = vtanh.pop %v1222
        %v1293 = vtanh.pop %v1224
        %v1294 = vtanh.pop %v1228
        %v1295 = vtanh.pop %v1230
        %v1296 = vtanh.pop %v1232
        %v1297 = vtanh.pop %v1234
        %v1298 = vtanh.pop %v1238
        %v1299 = vtanh.pop %v1240
        %v1300 = vtanh.pop %v1242
        %v1301 = vtanh.pop %v1244
        %v1302 = vtanh.pop %v1248
        %v1303 = vtanh.pop %v1250
        %v1304 = vtanh.pop %v1252
        %v1305 = vtanh.pop %v1254
        %v1306 = vtanh.pop %v1258
        %v1307 = vtanh.pop %v1260
        %v1308 = vtanh.pop %v1262
        %v1309 = vtanh.pop %v1264
        %v1310 = vtanh.pop %v1268
        %v1311 = vtanh.pop %v1270
        %v1312 = vtanh.pop %v1272
        %v1313 = vtanh.pop %v1274
        %v1314 = vtanh.pop %v1278
        %v1315 = vtanh.pop %v1280
        %v1316 = vtanh.pop %v1282
        %v1317 = vtanh.pop %v1284
        %s1318 = scalar_lea.vmem %s3, 64
        %v1319 = vld [vmem:[%s1318] sm:$0xf]
        %v1320 = vld [vmem:[%s1318 + $0x4] sm:$0xf]
        %v1321 = vld [vmem:[%s1318 + $0x8] sm:$0xf]
        %v1322 = vld [vmem:[%s1318 + $0xc] sm:$0xf]
        %v1323 = vld [vmem:[%s1318 + $0x10] sm:$0xf]
        %v1324 = vld [vmem:[%s1318 + $0x14] sm:$0xf]
        %v1325 = vld [vmem:[%s1318 + $0x18] sm:$0xf]
        %v1326 = vld [vmem:[%s1318 + $0x1c] sm:$0xf]
        %v1327 = vld [vmem:[%s1318 + $0x20] sm:$0xf]
        %v1328 = vld [vmem:[%s1318 + $0x24] sm:$0xf]
        %v1329 = vld [vmem:[%s1318 + $0x28] sm:$0xf]
        %v1330 = vld [vmem:[%s1318 + $0x2c] sm:$0xf]
        %v1331 = vld [vmem:[%s1318 + $0x30] sm:$0xf]
        %v1332 = vld [vmem:[%s1318 + $0x34] sm:$0xf]
        %v1333 = vld [vmem:[%s1318 + $0x38] sm:$0xf]
        %v1334 = vld [vmem:[%s1318 + $0x3c] sm:$0xf]
        %v1335 = vpack.c.bf16 %v1288, %v1286
        %v1336 = vpack.c.bf16 %v1289, %v1287
        %v1337 = vpack.c.bf16 %v1292, %v1290
        %v1338 = vpack.c.bf16 %v1293, %v1291
        %v1339 = vpack.c.bf16 %v1296, %v1294
        %v1340 = vpack.c.bf16 %v1297, %v1295
        %v1341 = vpack.c.bf16 %v1300, %v1298
        %v1342 = vpack.c.bf16 %v1301, %v1299
        %v1343 = vpack.c.bf16 %v1304, %v1302
        %v1344 = vpack.c.bf16 %v1305, %v1303
        %v1345 = vpack.c.bf16 %v1308, %v1306
        %v1346 = vpack.c.bf16 %v1309, %v1307
        %v1347 = vpack.c.bf16 %v1312, %v1310
        %v1348 = vpack.c.bf16 %v1313, %v1311
        %v1349 = vpack.c.bf16 %v1316, %v1314
        %v1350 = vpack.c.bf16 %v1317, %v1315
        %s1351 = scalar_lea.vmem %s4, 128
        %v1352 = vld [vmem:[%s1351] sm:$0xff]
        %v1353 = vld [vmem:[%s1351 + $0x8] sm:$0xff]
        %v1354 = vld [vmem:[%s1351 + $0x10] sm:$0xff]
        %v1355 = vld [vmem:[%s1351 + $0x18] sm:$0xff]
        %v1356 = vld [vmem:[%s1351 + $0x20] sm:$0xff]
        %v1357 = vld [vmem:[%s1351 + $0x28] sm:$0xff]
        %v1358 = vld [vmem:[%s1351 + $0x30] sm:$0xff]
        %v1359 = vld [vmem:[%s1351 + $0x38] sm:$0xff]
        %v1360 = vld [vmem:[%s1351 + $0x40] sm:$0xff]
        %v1361 = vld [vmem:[%s1351 + $0x48] sm:$0xff]
        %v1362 = vld [vmem:[%s1351 + $0x50] sm:$0xff]
        %v1363 = vld [vmem:[%s1351 + $0x58] sm:$0xff]
        %v1364 = vld [vmem:[%s1351 + $0x60] sm:$0xff]
        %v1365 = vld [vmem:[%s1351 + $0x68] sm:$0xff]
        %v1366 = vld [vmem:[%s1351 + $0x70] sm:$0xff]
        %v1367 = vld [vmem:[%s1351 + $0x78] sm:$0xff]
        %1369 = vset.pattern.permute.xlu0 0
        %1370 = vperm.xlu0 %1369, %v1352
        %v1371 = vpop.permute.xlu0 %1370
        %1374 = vset.pattern.permute.xlu0 0
        %1375 = vperm.xlu0 %1374, %v1353
        %v1376 = vpop.permute.xlu0 %1375
        %1379 = vset.pattern.permute.xlu0 0
        %1380 = vperm.xlu0 %1379, %v1354
        %v1381 = vpop.permute.xlu0 %1380
        %1384 = vset.pattern.permute.xlu0 0
        %1385 = vperm.xlu0 %1384, %v1355
        %v1386 = vpop.permute.xlu0 %1385
        %1389 = vset.pattern.permute.xlu0 0
        %1390 = vperm.xlu0 %1389, %v1356
        %v1391 = vpop.permute.xlu0 %1390
        %1394 = vset.pattern.permute.xlu0 0
        %1395 = vperm.xlu0 %1394, %v1357
        %v1396 = vpop.permute.xlu0 %1395
        %1399 = vset.pattern.permute.xlu0 0
        %1400 = vperm.xlu0 %1399, %v1358
        %v1401 = vpop.permute.xlu0 %1400
        %1404 = vset.pattern.permute.xlu0 0
        %1405 = vperm.xlu0 %1404, %v1359
        %v1406 = vpop.permute.xlu0 %1405
        %1409 = vset.pattern.permute.xlu0 0
        %1410 = vperm.xlu0 %1409, %v1360
        %v1411 = vpop.permute.xlu0 %1410
        %1414 = vset.pattern.permute.xlu0 0
        %1415 = vperm.xlu0 %1414, %v1361
        %v1416 = vpop.permute.xlu0 %1415
        %1419 = vset.pattern.permute.xlu0 0
        %1420 = vperm.xlu0 %1419, %v1362
        %v1421 = vpop.permute.xlu0 %1420
        %1424 = vset.pattern.permute.xlu0 0
        %1425 = vperm.xlu0 %1424, %v1363
        %v1426 = vpop.permute.xlu0 %1425
        %1429 = vset.pattern.permute.xlu0 0
        %1430 = vperm.xlu0 %1429, %v1364
        %v1431 = vpop.permute.xlu0 %1430
        %1434 = vset.pattern.permute.xlu0 0
        %1435 = vperm.xlu0 %1434, %v1365
        %v1436 = vpop.permute.xlu0 %1435
        %1439 = vset.pattern.permute.xlu0 0
        %1440 = vperm.xlu0 %1439, %v1366
        %v1441 = vpop.permute.xlu0 %1440
        %1444 = vset.pattern.permute.xlu0 0
        %1445 = vperm.xlu0 %1444, %v1367
        %v1446 = vpop.permute.xlu0 %1445
        %v1464 = vunpack.c.l.b16 %v1319
        %v1465 = vunpack.c.l.b16 %v1320
        %v1466 = vunpack.c.l.b16 %v1321
        %v1467 = vunpack.c.l.b16 %v1322
        %v1468 = vunpack.c.l.b16 %v1323
        %v1469 = vunpack.c.l.b16 %v1324
        %v1470 = vunpack.c.l.b16 %v1325
        %v1471 = vunpack.c.l.b16 %v1326
        %v1472 = vunpack.c.l.b16 %v1327
        %v1473 = vunpack.c.l.b16 %v1328
        %v1474 = vunpack.c.l.b16 %v1329
        %v1475 = vunpack.c.l.b16 %v1330
        %v1476 = vunpack.c.l.b16 %v1331
        %v1477 = vunpack.c.l.b16 %v1332
        %v1478 = vunpack.c.l.b16 %v1333
        %v1479 = vunpack.c.l.b16 %v1334
        %v1480 = vpack.c.b16 %v1465, %v1464
        %v1481 = vpack.c.b16 %v1467, %v1466
        %v1482 = vpack.c.b16 %v1469, %v1468
        %v1483 = vpack.c.b16 %v1471, %v1470
        %v1484 = vpack.c.b16 %v1473, %v1472
        %v1485 = vpack.c.b16 %v1475, %v1474
        %v1486 = vpack.c.b16 %v1477, %v1476
        %v1487 = vpack.c.b16 %v1479, %v1478
        %1496 = vmatprep.subr.bf16.mxu0 %v1336
        %1497 = vmatpush1.bf16.msra.mxu0 %v1335
        %1498 = vmatprep.subr.bf16.mxu0 %v1338
        %1499 = vmatpush1.bf16.msra.mxu0 %v1337
        %1500 = vmatprep.subr.bf16.mxu0 %v1340
        %1501 = vmatpush1.bf16.msra.mxu0 %v1339
        %1502 = vmatprep.subr.bf16.mxu0 %v1342
        %1503 = vmatpush1.bf16.msra.mxu0 %v1341
        %1504 = vmatprep.subr.bf16.mxu0 %v1344
        %1505 = vmatpush1.bf16.msra.mxu0 %v1343
        %1506 = vmatprep.subr.bf16.mxu0 %v1346
        %1507 = vmatpush1.bf16.msra.mxu0 %v1345
        %1508 = vmatprep.subr.bf16.mxu0 %v1348
        %1509 = vmatpush1.bf16.msra.mxu0 %v1347
        %1510 = vmatprep.subr.bf16.mxu0 %v1350
        %1511 = vmatpush1.bf16.msra.mxu0 %v1349
        %1512 = vmatprep.subr.bf16.mxu0 0
        %1513 = vmatpush1.bf16.msra.mxu0 0
        %1514 = vmatprep.subr.bf16.mxu0 0
        %1515 = vmatpush1.bf16.msra.mxu0 0
        %1516 = vmatprep.subr.bf16.mxu0 0
        %1517 = vmatpush1.bf16.msra.mxu0 0
        %1518 = vmatprep.subr.bf16.mxu0 0
        %1519 = vmatpush1.bf16.msra.mxu0 0
        %1520 = vmatprep.subr.bf16.mxu0 0
        %1521 = vmatpush1.bf16.msra.mxu0 0
        %1522 = vmatprep.subr.bf16.mxu0 0
        %1523 = vmatpush1.bf16.msra.mxu0 0
        %1524 = vmatprep.subr.bf16.mxu0 0
        %1525 = vmatpush1.bf16.msra.mxu0 0
        %1526 = vmatprep.subr.bf16.mxu0 0
        %1527 = vmatpush1.bf16.msra.mxu0 0
        %1528 = vmatprep.mubr.bf16.mxu0 0
        %1529 = vmatmul.mubr.bf16.gmra.mrb[0].mxu0 %v1480
        %v1530 = vpop.f32.mrb[0].mxu0
        %v1531 = vadd.f32 %v1371, %v1530
        %v1532 = vpop.f32.mrb[0].mxu0
        %v1533 = vadd.f32 %v1371, %v1532
        %v1534 = vpop.f32.mrb[0].mxu0
        %v1535 = vadd.f32 %v1376, %v1534
        %v1536 = vpop.f32.mrb[0].mxu0
        %v1537 = vadd.f32 %v1376, %v1536
        %1538 = vmatprep.mubr.bf16.mxu0 0
        %1539 = vmatmul.mubr.bf16.gmra.mrb[0].mxu0 %v1481
        %v1540 = vpop.f32.mrb[0].mxu0
        %v1541 = vadd.f32 %v1381, %v1540
        %v1542 = vpop.f32.mrb[0].mxu0
        %v1543 = vadd.f32 %v1381, %v1542
        %v1544 = vpop.f32.mrb[0].mxu0
        %v1545 = vadd.f32 %v1386, %v1544
        %v1546 = vpop.f32.mrb[0].mxu0
        %v1547 = vadd.f32 %v1386, %v1546
        %1548 = vmatprep.mubr.bf16.mxu0 0
        %1549 = vmatmul.mubr.bf16.gmra.mrb[0].mxu0 %v1482
        %v1550 = vpop.f32.mrb[0].mxu0
        %v1551 = vadd.f32 %v1391, %v1550
        %v1552 = vpop.f32.mrb[0].mxu0
        %v1553 = vadd.f32 %v1391, %v1552
        %v1554 = vpop.f32.mrb[0].mxu0
        %v1555 = vadd.f32 %v1396, %v1554
        %v1556 = vpop.f32.mrb[0].mxu0
        %v1557 = vadd.f32 %v1396, %v1556
        %1558 = vmatprep.mubr.bf16.mxu0 0
        %1559 = vmatmul.mubr.bf16.gmra.mrb[0].mxu0 %v1483
        %v1560 = vpop.f32.mrb[0].mxu0
        %v1561 = vadd.f32 %v1401, %v1560
        %v1562 = vpop.f32.mrb[0].mxu0
        %v1563 = vadd.f32 %v1401, %v1562
        %v1564 = vpop.f32.mrb[0].mxu0
        %v1565 = vadd.f32 %v1406, %v1564
        %v1566 = vpop.f32.mrb[0].mxu0
        %v1567 = vadd.f32 %v1406, %v1566
        %1568 = vmatprep.mubr.bf16.mxu0 0
        %1569 = vmatmul.mubr.bf16.gmra.mrb[0].mxu0 %v1484
        %v1570 = vpop.f32.mrb[0].mxu0
        %v1571 = vadd.f32 %v1411, %v1570
        %v1572 = vpop.f32.mrb[0].mxu0
        %v1573 = vadd.f32 %v1411, %v1572
        %v1574 = vpop.f32.mrb[0].mxu0
        %v1575 = vadd.f32 %v1416, %v1574
        %v1576 = vpop.f32.mrb[0].mxu0
        %v1577 = vadd.f32 %v1416, %v1576
        %1578 = vmatprep.mubr.bf16.mxu0 0
        %1579 = vmatmul.mubr.bf16.gmra.mrb[0].mxu0 %v1485
        %v1580 = vpop.f32.mrb[0].mxu0
        %v1581 = vadd.f32 %v1421, %v1580
        %v1582 = vpop.f32.mrb[0].mxu0
        %v1583 = vadd.f32 %v1421, %v1582
        %v1584 = vpop.f32.mrb[0].mxu0
        %v1585 = vadd.f32 %v1426, %v1584
        %v1586 = vpop.f32.mrb[0].mxu0
        %v1587 = vadd.f32 %v1426, %v1586
        %1588 = vmatprep.mubr.bf16.mxu0 0
        %1589 = vmatmul.mubr.bf16.gmra.mrb[0].mxu0 %v1486
        %v1590 = vpop.f32.mrb[0].mxu0
        %v1591 = vadd.f32 %v1431, %v1590
        %v1592 = vpop.f32.mrb[0].mxu0
        %v1593 = vadd.f32 %v1431, %v1592
        %v1594 = vpop.f32.mrb[0].mxu0
        %v1595 = vadd.f32 %v1436, %v1594
        %v1596 = vpop.f32.mrb[0].mxu0
        %v1597 = vadd.f32 %v1436, %v1596
        %1598 = vmatprep.mubr.bf16.mxu0 0
        %1599 = vmatmul.mubr.bf16.gmra.mrb[0].mxu0 %v1487
        %v1600 = vpop.f32.mrb[0].mxu0
        %v1601 = vadd.f32 %v1441, %v1600
        %v1602 = vpop.f32.mrb[0].mxu0
        %v1603 = vadd.f32 %v1441, %v1602
        %v1604 = vpop.f32.mrb[0].mxu0
        %v1605 = vadd.f32 %v1446, %v1604
        %v1606 = vpop.f32.mrb[0].mxu0
        %v1607 = vadd.f32 %v1446, %v1606
        %1608 = vdwg.mxu0
        %v1609 = vtanh.pop %v1531
        %v1610 = vtanh.pop %v1533
        %v1611 = vtanh.pop %v1535
        %v1612 = vtanh.pop %v1537
        %v1613 = vtanh.pop %v1541
        %v1614 = vtanh.pop %v1543
        %v1615 = vtanh.pop %v1545
        %v1616 = vtanh.pop %v1547
        %v1617 = vtanh.pop %v1551
        %v1618 = vtanh.pop %v1553
        %v1619 = vtanh.pop %v1555
        %v1620 = vtanh.pop %v1557
        %v1621 = vtanh.pop %v1561
        %v1622 = vtanh.pop %v1563
        %v1623 = vtanh.pop %v1565
        %v1624 = vtanh.pop %v1567
        %v1625 = vtanh.pop %v1571
        %v1626 = vtanh.pop %v1573
        %v1627 = vtanh.pop %v1575
        %v1628 = vtanh.pop %v1577
        %v1629 = vtanh.pop %v1581
        %v1630 = vtanh.pop %v1583
        %v1631 = vtanh.pop %v1585
        %v1632 = vtanh.pop %v1587
        %v1633 = vtanh.pop %v1591
        %v1634 = vtanh.pop %v1593
        %v1635 = vtanh.pop %v1595
        %v1636 = vtanh.pop %v1597
        %v1637 = vtanh.pop %v1601
        %v1638 = vtanh.pop %v1603
        %v1639 = vtanh.pop %v1605
        %v1640 = vtanh.pop %v1607
        %s1641 = scalar_lea.vmem %s3, 128
        %v1642 = vld [vmem:[%s1641] sm:$0xf]
        %v1643 = vld [vmem:[%s1641 + $0x4] sm:$0xf]
        %v1644 = vld [vmem:[%s1641 + $0x8] sm:$0xf]
        %v1645 = vld [vmem:[%s1641 + $0xc] sm:$0xf]
        %v1646 = vld [vmem:[%s1641 + $0x10] sm:$0xf]
        %v1647 = vld [vmem:[%s1641 + $0x14] sm:$0xf]
        %v1648 = vld [vmem:[%s1641 + $0x18] sm:$0xf]
        %v1649 = vld [vmem:[%s1641 + $0x1c] sm:$0xf]
        %v1650 = vld [vmem:[%s1641 + $0x20] sm:$0xf]
        %v1651 = vld [vmem:[%s1641 + $0x24] sm:$0xf]
        %v1652 = vld [vmem:[%s1641 + $0x28] sm:$0xf]
        %v1653 = vld [vmem:[%s1641 + $0x2c] sm:$0xf]
        %v1654 = vld [vmem:[%s1641 + $0x30] sm:$0xf]
        %v1655 = vld [vmem:[%s1641 + $0x34] sm:$0xf]
        %v1656 = vld [vmem:[%s1641 + $0x38] sm:$0xf]
        %v1657 = vld [vmem:[%s1641 + $0x3c] sm:$0xf]
        %v1658 = vpack.c.bf16 %v1611, %v1609
        %v1659 = vpack.c.bf16 %v1612, %v1610
        %v1660 = vpack.c.bf16 %v1615, %v1613
        %v1661 = vpack.c.bf16 %v1616, %v1614
        %v1662 = vpack.c.bf16 %v1619, %v1617
        %v1663 = vpack.c.bf16 %v1620, %v1618
        %v1664 = vpack.c.bf16 %v1623, %v1621
        %v1665 = vpack.c.bf16 %v1624, %v1622
        %v1666 = vpack.c.bf16 %v1627, %v1625
        %v1667 = vpack.c.bf16 %v1628, %v1626
        %v1668 = vpack.c.bf16 %v1631, %v1629
        %v1669 = vpack.c.bf16 %v1632, %v1630
        %v1670 = vpack.c.bf16 %v1635, %v1633
        %v1671 = vpack.c.bf16 %v1636, %v1634
        %v1672 = vpack.c.bf16 %v1639, %v1637
        %v1673 = vpack.c.bf16 %v1640, %v1638
        %s1674 = scalar_lea.vmem %s4, 256
        %v1675 = vld [vmem:[%s1674] sm:$0xff]
        %v1676 = vld [vmem:[%s1674 + $0x8] sm:$0xff]
        %v1677 = vld [vmem:[%s1674 + $0x10] sm:$0xff]
        %v1678 = vld [vmem:[%s1674 + $0x18] sm:$0xff]
        %v1679 = vld [vmem:[%s1674 + $0x20] sm:$0xff]
        %v1680 = vld [vmem:[%s1674 + $0x28] sm:$0xff]
        %v1681 = vld [vmem:[%s1674 + $0x30] sm:$0xff]
        %v1682 = vld [vmem:[%s1674 + $0x38] sm:$0xff]
        %v1683 = vld [vmem:[%s1674 + $0x40] sm:$0xff]
        %v1684 = vld [vmem:[%s1674 + $0x48] sm:$0xff]
        %v1685 = vld [vmem:[%s1674 + $0x50] sm:$0xff]
        %v1686 = vld [vmem:[%s1674 + $0x58] sm:$0xff]
        %v1687 = vld [vmem:[%s1674 + $0x60] sm:$0xff]
        %v1688 = vld [vmem:[%s1674 + $0x68] sm:$0xff]
        %v1689 = vld [vmem:[%s1674 + $0x70] sm:$0xff]
        %v1690 = vld [vmem:[%s1674 + $0x78] sm:$0xff]
        %1692 = vset.pattern.permute.xlu0 0
        %1693 = vperm.xlu0 %1692, %v1675
        %v1694 = vpop.permute.xlu0 %1693
        %1697 = vset.pattern.permute.xlu0 0
        %1698 = vperm.xlu0 %1697, %v1676
        %v1699 = vpop.permute.xlu0 %1698
        %1702 = vset.pattern.permute.xlu0 0
        %1703 = vperm.xlu0 %1702, %v1677
        %v1704 = vpop.permute.xlu0 %1703
        %1707 = vset.pattern.permute.xlu0 0
        %1708 = vperm.xlu0 %1707, %v1678
        %v1709 = vpop.permute.xlu0 %1708
        %1712 = vset.pattern.permute.xlu0 0
        %1713 = vperm.xlu0 %1712, %v1679
        %v1714 = vpop.permute.xlu0 %1713
        %1717 = vset.pattern.permute.xlu0 0
        %1718 = vperm.xlu0 %1717, %v1680
        %v1719 = vpop.permute.xlu0 %1718
        %1722 = vset.pattern.permute.xlu0 0
        %1723 = vperm.xlu0 %1722, %v1681
        %v1724 = vpop.permute.xlu0 %1723
        %1727 = vset.pattern.permute.xlu0 0
        %1728 = vperm.xlu0 %1727, %v1682
        %v1729 = vpop.permute.xlu0 %1728
        %1732 = vset.pattern.permute.xlu0 0
        %1733 = vperm.xlu0 %1732, %v1683
        %v1734 = vpop.permute.xlu0 %1733
        %1737 = vset.pattern.permute.xlu0 0
        %1738 = vperm.xlu0 %1737, %v1684
        %v1739 = vpop.permute.xlu0 %1738
        %1742 = vset.pattern.permute.xlu0 0
        %1743 = vperm.xlu0 %1742, %v1685
        %v1744 = vpop.permute.xlu0 %1743
        %1747 = vset.pattern.permute.xlu0 0
        %1748 = vperm.xlu0 %1747, %v1686
        %v1749 = vpop.permute.xlu0 %1748
        %1752 = vset.pattern.permute.xlu0 0
        %1753 = vperm.xlu0 %1752, %v1687
        %v1754 = vpop.permute.xlu0 %1753
        %1757 = vset.pattern.permute.xlu0 0
        %1758 = vperm.xlu0 %1757, %v1688
        %v1759 = vpop.permute.xlu0 %1758
        %1762 = vset.pattern.permute.xlu0 0
        %1763 = vperm.xlu0 %1762, %v1689
        %v1764 = vpop.permute.xlu0 %1763
        %1767 = vset.pattern.permute.xlu0 0
        %1768 = vperm.xlu0 %1767, %v1690
        %v1769 = vpop.permute.xlu0 %1768
        %v1787 = vunpack.c.l.b16 %v1642
        %v1788 = vunpack.c.l.b16 %v1643
        %v1789 = vunpack.c.l.b16 %v1644
        %v1790 = vunpack.c.l.b16 %v1645
        %v1791 = vunpack.c.l.b16 %v1646
        %v1792 = vunpack.c.l.b16 %v1647
        %v1793 = vunpack.c.l.b16 %v1648
        %v1794 = vunpack.c.l.b16 %v1649
        %v1795 = vunpack.c.l.b16 %v1650
        %v1796 = vunpack.c.l.b16 %v1651
        %v1797 = vunpack.c.l.b16 %v1652
        %v1798 = vunpack.c.l.b16 %v1653
        %v1799 = vunpack.c.l.b16 %v1654
        %v1800 = vunpack.c.l.b16 %v1655
        %v1801 = vunpack.c.l.b16 %v1656
        %v1802 = vunpack.c.l.b16 %v1657
        %v1803 = vpack.c.b16 %v1788, %v1787
        %v1804 = vpack.c.b16 %v1790, %v1789
        %v1805 = vpack.c.b16 %v1792, %v1791
        %v1806 = vpack.c.b16 %v1794, %v1793
        %v1807 = vpack.c.b16 %v1796, %v1795
        %v1808 = vpack.c.b16 %v1798, %v1797
        %v1809 = vpack.c.b16 %v1800, %v1799
        %v1810 = vpack.c.b16 %v1802, %v1801
        %1819 = vmatprep.subr.bf16.mxu0 %v1659
        %1820 = vmatpush1.bf16.msra.mxu0 %v1658
        %1821 = vmatprep.subr.bf16.mxu0 %v1661
        %1822 = vmatpush1.bf16.msra.mxu0 %v1660
        %1823 = vmatprep.subr.bf16.mxu0 %v1663
        %1824 = vmatpush1.bf16.msra.mxu0 %v1662
        %1825 = vmatprep.subr.bf16.mxu0 %v1665
        %1826 = vmatpush1.bf16.msra.mxu0 %v1664
        %1827 = vmatprep.subr.bf16.mxu0 %v1667
        %1828 = vmatpush1.bf16.msra.mxu0 %v1666
        %1829 = vmatprep.subr.bf16.mxu0 %v1669
        %1830 = vmatpush1.bf16.msra.mxu0 %v1668
        %1831 = vmatprep.subr.bf16.mxu0 %v1671
        %1832 = vmatpush1.bf16.msra.mxu0 %v1670
        %1833 = vmatprep.subr.bf16.mxu0 %v1673
        %1834 = vmatpush1.bf16.msra.mxu0 %v1672
        %1835 = vmatprep.subr.bf16.mxu0 0
        %1836 = vmatpush1.bf16.msra.mxu0 0
        %1837 = vmatprep.subr.bf16.mxu0 0
        %1838 = vmatpush1.bf16.msra.mxu0 0
        %1839 = vmatprep.subr.bf16.mxu0 0
        %1840 = vmatpush1.bf16.msra.mxu0 0
        %1841 = vmatprep.subr.bf16.mxu0 0
        %1842 = vmatpush1.bf16.msra.mxu0 0
        %1843 = vmatprep.subr.bf16.mxu0 0
        %1844 = vmatpush1.bf16.msra.mxu0 0
        %1845 = vmatprep.subr.bf16.mxu0 0
        %1846 = vmatpush1.bf16.msra.mxu0 0
        %1847 = vmatprep.subr.bf16.mxu0 0
        %1848 = vmatpush1.bf16.msra.mxu0 0
        %1849 = vmatprep.subr.bf16.mxu0 0
        %1850 = vmatpush1.bf16.msra.mxu0 0
        %1851 = vmatprep.mubr.bf16.mxu0 0
        %1852 = vmatmul.mubr.bf16.gmra.mrb[0].mxu0 %v1803
        %v1853 = vpop.f32.mrb[0].mxu0
        %v1854 = vadd.f32 %v1694, %v1853
        %v1855 = vpop.f32.mrb[0].mxu0
        %v1856 = vadd.f32 %v1694, %v1855
        %v1857 = vpop.f32.mrb[0].mxu0
        %v1858 = vadd.f32 %v1699, %v1857
        %v1859 = vpop.f32.mrb[0].mxu0
        %v1860 = vadd.f32 %v1699, %v1859
        %1861 = vmatprep.mubr.bf16.mxu0 0
        %1862 = vmatmul.mubr.bf16.gmra.mrb[0].mxu0 %v1804
        %v1863 = vpop.f32.mrb[0].mxu0
        %v1864 = vadd.f32 %v1704, %v1863
        %v1865 = vpop.f32.mrb[0].mxu0
        %v1866 = vadd.f32 %v1704, %v1865
        %v1867 = vpop.f32.mrb[0].mxu0
        %v1868 = vadd.f32 %v1709, %v1867
        %v1869 = vpop.f32.mrb[0].mxu0
        %v1870 = vadd.f32 %v1709, %v1869
        %1871 = vmatprep.mubr.bf16.mxu0 0
        %1872 = vmatmul.mubr.bf16.gmra.mrb[0].mxu0 %v1805
        %v1873 = vpop.f32.mrb[0].mxu0
        %v1874 = vadd.f32 %v1714, %v1873
        %v1875 = vpop.f32.mrb[0].mxu0
        %v1876 = vadd.f32 %v1714, %v1875
        %v1877 = vpop.f32.mrb[0].mxu0
        %v1878 = vadd.f32 %v1719, %v1877
        %v1879 = vpop.f32.mrb[0].mxu0
        %v1880 = vadd.f32 %v1719, %v1879
        %1881 = vmatprep.mubr.bf16.mxu0 0
        %1882 = vmatmul.mubr.bf16.gmra.mrb[0].mxu0 %v1806
        %v1883 = vpop.f32.mrb[0].mxu0
        %v1884 = vadd.f32 %v1724, %v1883
        %v1885 = vpop.f32.mrb[0].mxu0
        %v1886 = vadd.f32 %v1724, %v1885
        %v1887 = vpop.f32.mrb[0].mxu0
        %v1888 = vadd.f32 %v1729, %v1887
        %v1889 = vpop.f32.mrb[0].mxu0
        %v1890 = vadd.f32 %v1729, %v1889
        %1891 = vmatprep.mubr.bf16.mxu0 0
        %1892 = vmatmul.mubr.bf16.gmra.mrb[0].mxu0 %v1807
        %v1893 = vpop.f32.mrb[0].mxu0
        %v1894 = vadd.f32 %v1734, %v1893
        %v1895 = vpop.f32.mrb[0].mxu0
        %v1896 = vadd.f32 %v1734, %v1895
        %v1897 = vpop.f32.mrb[0].mxu0
        %v1898 = vadd.f32 %v1739, %v1897
        %v1899 = vpop.f32.mrb[0].mxu0
        %v1900 = vadd.f32 %v1739, %v1899
        %1901 = vmatprep.mubr.bf16.mxu0 0
        %1902 = vmatmul.mubr.bf16.gmra.mrb[0].mxu0 %v1808
        %v1903 = vpop.f32.mrb[0].mxu0
        %v1904 = vadd.f32 %v1744, %v1903
        %v1905 = vpop.f32.mrb[0].mxu0
        %v1906 = vadd.f32 %v1744, %v1905
        %v1907 = vpop.f32.mrb[0].mxu0
        %v1908 = vadd.f32 %v1749, %v1907
        %v1909 = vpop.f32.mrb[0].mxu0
        %v1910 = vadd.f32 %v1749, %v1909
        %1911 = vmatprep.mubr.bf16.mxu0 0
        %1912 = vmatmul.mubr.bf16.gmra.mrb[0].mxu0 %v1809
        %v1913 = vpop.f32.mrb[0].mxu0
        %v1914 = vadd.f32 %v1754, %v1913
        %v1915 = vpop.f32.mrb[0].mxu0
        %v1916 = vadd.f32 %v1754, %v1915
        %v1917 = vpop.f32.mrb[0].mxu0
        %v1918 = vadd.f32 %v1759, %v1917
        %v1919 = vpop.f32.mrb[0].mxu0
        %v1920 = vadd.f32 %v1759, %v1919
        %1921 = vmatprep.mubr.bf16.mxu0 0
        %1922 = vmatmul.mubr.bf16.gmra.mrb[0].mxu0 %v1810
        %v1923 = vpop.f32.mrb[0].mxu0
        %v1924 = vadd.f32 %v1764, %v1923
        %v1925 = vpop.f32.mrb[0].mxu0
        %v1926 = vadd.f32 %v1764, %v1925
        %v1927 = vpop.f32.mrb[0].mxu0
        %v1928 = vadd.f32 %v1769, %v1927
        %v1929 = vpop.f32.mrb[0].mxu0
        %v1930 = vadd.f32 %v1769, %v1929
        %1931 = vdwg.mxu0
        %v1932 = vtanh.pop %v1854
        %v1933 = vtanh.pop %v1856
        %v1934 = vtanh.pop %v1858
        %v1935 = vtanh.pop %v1860
        %v1936 = vtanh.pop %v1864
        %v1937 = vtanh.pop %v1866
        %v1938 = vtanh.pop %v1868
        %v1939 = vtanh.pop %v1870
        %v1940 = vtanh.pop %v1874
        %v1941 = vtanh.pop %v1876
        %v1942 = vtanh.pop %v1878
        %v1943 = vtanh.pop %v1880
        %v1944 = vtanh.pop %v1884
        %v1945 = vtanh.pop %v1886
        %v1946 = vtanh.pop %v1888
        %v1947 = vtanh.pop %v1890
        %v1948 = vtanh.pop %v1894
        %v1949 = vtanh.pop %v1896
        %v1950 = vtanh.pop %v1898
        %v1951 = vtanh.pop %v1900
        %v1952 = vtanh.pop %v1904
        %v1953 = vtanh.pop %v1906
        %v1954 = vtanh.pop %v1908
        %v1955 = vtanh.pop %v1910
        %v1956 = vtanh.pop %v1914
        %v1957 = vtanh.pop %v1916
        %v1958 = vtanh.pop %v1918
        %v1959 = vtanh.pop %v1920
        %v1960 = vtanh.pop %v1924
        %v1961 = vtanh.pop %v1926
        %v1962 = vtanh.pop %v1928
        %v1963 = vtanh.pop %v1930
        %v1964 = vld [vmem:[%s5] sm:$0xff]
        %v1965 = vld [vmem:[%s5 + $0x8] sm:$0xff]
        %v1966 = vld [vmem:[%s5 + $0x10] sm:$0xff]
        %v1967 = vld [vmem:[%s5 + $0x18] sm:$0xff]
        %v1968 = vld [vmem:[%s5 + $0x20] sm:$0xff]
        %v1969 = vld [vmem:[%s5 + $0x28] sm:$0xff]
        %v1970 = vld [vmem:[%s5 + $0x30] sm:$0xff]
        %v1971 = vld [vmem:[%s5 + $0x38] sm:$0xff]
        %v1972 = vld [vmem:[%s5 + $0x40] sm:$0xff]
        %v1973 = vld [vmem:[%s5 + $0x48] sm:$0xff]
        %v1974 = vld [vmem:[%s5 + $0x50] sm:$0xff]
        %v1975 = vld [vmem:[%s5 + $0x58] sm:$0xff]
        %v1976 = vld [vmem:[%s5 + $0x60] sm:$0xff]
        %v1977 = vld [vmem:[%s5 + $0x68] sm:$0xff]
        %v1978 = vld [vmem:[%s5 + $0x70] sm:$0xff]
        %v1979 = vld [vmem:[%s5 + $0x78] sm:$0xff]
        %1981 = vset.pattern.permute.xlu0 0
        %1982 = vperm.xlu0 %1981, %v1964
        %v1983 = vpop.permute.xlu0 %1982
        %1986 = vset.pattern.permute.xlu0 0
        %1987 = vperm.xlu0 %1986, %v1965
        %v1988 = vpop.permute.xlu0 %1987
        %1991 = vset.pattern.permute.xlu0 0
        %1992 = vperm.xlu0 %1991, %v1966
        %v1993 = vpop.permute.xlu0 %1992
        %1996 = vset.pattern.permute.xlu0 0
        %1997 = vperm.xlu0 %1996, %v1967
        %v1998 = vpop.permute.xlu0 %1997
        %2001 = vset.pattern.permute.xlu0 0
        %2002 = vperm.xlu0 %2001, %v1968
        %v2003 = vpop.permute.xlu0 %2002
        %2006 = vset.pattern.permute.xlu0 0
        %2007 = vperm.xlu0 %2006, %v1969
        %v2008 = vpop.permute.xlu0 %2007
        %2011 = vset.pattern.permute.xlu0 0
        %2012 = vperm.xlu0 %2011, %v1970
        %v2013 = vpop.permute.xlu0 %2012
        %2016 = vset.pattern.permute.xlu0 0
        %2017 = vperm.xlu0 %2016, %v1971
        %v2018 = vpop.permute.xlu0 %2017
        %2021 = vset.pattern.permute.xlu0 0
        %2022 = vperm.xlu0 %2021, %v1972
        %v2023 = vpop.permute.xlu0 %2022
        %2026 = vset.pattern.permute.xlu0 0
        %2027 = vperm.xlu0 %2026, %v1973
        %v2028 = vpop.permute.xlu0 %2027
        %2031 = vset.pattern.permute.xlu0 0
        %2032 = vperm.xlu0 %2031, %v1974
        %v2033 = vpop.permute.xlu0 %2032
        %2036 = vset.pattern.permute.xlu0 0
        %2037 = vperm.xlu0 %2036, %v1975
        %v2038 = vpop.permute.xlu0 %2037
        %2041 = vset.pattern.permute.xlu0 0
        %2042 = vperm.xlu0 %2041, %v1976
        %v2043 = vpop.permute.xlu0 %2042
        %2046 = vset.pattern.permute.xlu0 0
        %2047 = vperm.xlu0 %2046, %v1977
        %v2048 = vpop.permute.xlu0 %2047
        %2051 = vset.pattern.permute.xlu0 0
        %2052 = vperm.xlu0 %2051, %v1978
        %v2053 = vpop.permute.xlu0 %2052
        %2056 = vset.pattern.permute.xlu0 0
        %2057 = vperm.xlu0 %2056, %v1979
        %v2058 = vpop.permute.xlu0 %2057
        %v2060 = vmul.f32 %v1932, %v1983
        %v2061 = vmul.f32 %v1933, %v1983
        %v2062 = vmul.f32 %v1934, %v1988
        %v2063 = vmul.f32 %v1935, %v1988
        %v2064 = vmul.f32 %v1936, %v1993
        %v2065 = vmul.f32 %v1937, %v1993
        %v2066 = vmul.f32 %v1938, %v1998
        %v2067 = vmul.f32 %v1939, %v1998
        %v2068 = vmul.f32 %v1940, %v2003
        %v2069 = vmul.f32 %v1941, %v2003
        %v2070 = vmul.f32 %v1942, %v2008
        %v2071 = vmul.f32 %v1943, %v2008
        %v2072 = vmul.f32 %v1944, %v2013
        %v2073 = vmul.f32 %v1945, %v2013
        %v2074 = vmul.f32 %v1946, %v2018
        %v2075 = vmul.f32 %v1947, %v2018
        %v2076 = vmul.f32 %v1948, %v2023
        %v2077 = vmul.f32 %v1949, %v2023
        %v2078 = vmul.f32 %v1950, %v2028
        %v2079 = vmul.f32 %v1951, %v2028
        %v2080 = vmul.f32 %v1952, %v2033
        %v2081 = vmul.f32 %v1953, %v2033
        %v2082 = vmul.f32 %v1954, %v2038
        %v2083 = vmul.f32 %v1955, %v2038
        %v2084 = vmul.f32 %v1956, %v2043
        %v2085 = vmul.f32 %v1957, %v2043
        %v2086 = vmul.f32 %v1958, %v2048
        %v2087 = vmul.f32 %v1959, %v2048
        %v2088 = vmul.f32 %v1960, %v2053
        %v2089 = vmul.f32 %v1961, %v2053
        %v2090 = vmul.f32 %v1962, %v2058
        %v2091 = vmul.f32 %v1963, %v2058
        %v2092 = vadd.f32 %v2060, %v2062
        %v2093 = vadd.f32 %v2092, %v2064
        %v2094 = vadd.f32 %v2093, %v2066
        %v2095 = vadd.f32 %v2094, %v2068
        %v2096 = vadd.f32 %v2095, %v2070
        %v2097 = vadd.f32 %v2096, %v2072
        %v2098 = vadd.f32 %v2097, %v2074
        %v2099 = vadd.f32 %v2098, %v2076
        %v2100 = vadd.f32 %v2099, %v2078
        %v2101 = vadd.f32 %v2100, %v2080
        %v2102 = vadd.f32 %v2101, %v2082
        %v2103 = vadd.f32 %v2102, %v2084
        %v2104 = vadd.f32 %v2103, %v2086
        %v2105 = vadd.f32 %v2104, %v2088
        %v2106 = vadd.f32 %v2105, %v2090
        %v2107 = vrot.slane %v2106, 4
        %v2108 = vadd.f32 %v2106, %v2107
        %v2109 = vrot.slane %v2108, 2
        %v2110 = vadd.f32 %v2108, %v2109
        %v2111 = vrot.slane %v2110, 1
        %v2112 = vadd.f32 %v2110, %v2111
        %v2113 = vadd.f32 %v2061, %v2063
        %v2114 = vadd.f32 %v2113, %v2065
        %v2115 = vadd.f32 %v2114, %v2067
        %v2116 = vadd.f32 %v2115, %v2069
        %v2117 = vadd.f32 %v2116, %v2071
        %v2118 = vadd.f32 %v2117, %v2073
        %v2119 = vadd.f32 %v2118, %v2075
        %v2120 = vadd.f32 %v2119, %v2077
        %v2121 = vadd.f32 %v2120, %v2079
        %v2122 = vadd.f32 %v2121, %v2081
        %v2123 = vadd.f32 %v2122, %v2083
        %v2124 = vadd.f32 %v2123, %v2085
        %v2125 = vadd.f32 %v2124, %v2087
        %v2126 = vadd.f32 %v2125, %v2089
        %v2127 = vadd.f32 %v2126, %v2091
        %v2128 = vrot.slane %v2127, 4
        %v2129 = vadd.f32 %v2127, %v2128
        %v2130 = vrot.slane %v2129, 2
        %v2131 = vadd.f32 %v2129, %v2130
        %v2132 = vrot.slane %v2131, 1
        %v2133 = vadd.f32 %v2131, %v2132
        %v2134 = vld [vmem:[#allocation2] sm:$0x1]
        %2136 = vset.pattern.permute.xlu0 0
        %2137 = vperm.xlu0 %2136, %v2134
        %v2138 = vpop.permute.xlu0 %2137
        %v2140 = vlaneseq
        %v2141 = vshrl.u32 %v2140, 7
        %v2142 = vsub.s32 0, %v2141
        %v2143 = vrot.slane %v2138, %v2142
        %v2144 = vadd.f32 %v2112, %v2143
        %v2145 = vadd.f32 %v2133, %v2143
        %v2146 = vxor.u32 %v2144, 2147483648
        %v2147 = vxor.u32 %v2145, 2147483648
        %v2148 = vmul.f32 %v2146, 1.442695
        %v2149 = vpow.pop %v2148
        %v2150 = vmul.f32 %v2147, 1.442695
        %v2151 = vpow.pop %v2150
        %v2152 = vadd.f32 %v2149, 1.0
        %v2153 = vadd.f32 %v2151, 1.0
        %v2154 = vrcp.pop %v2152
        %v2155 = vmul.f32 1.0, %v2154
        %v2156 = vrcp.pop %v2153
        %v2157 = vmul.f32 1.0, %v2156
        %v2160 = vcombine.low %v2155, %v2157
        %v2162 = vunpack.c.l.s4 1966171168
        %v2163 = vunpack.c.0.s8 %v2162
        %v2164 = vlaneseq
        %v2165 = vshrl.u32 %v2164, 7
        %v2166 = vsub.s32 %v2163, %v2165
        %v2167 = vrot.slane %v2160, %v2166
        %v2169 = vunpack.c.l.s4 1966171168
        %v2170 = vunpack.c.0.s8 %v2169
        %v2171 = vlaneseq
        %v2172 = vshrl.u32 %v2171, 7
        %v2173 = vsub.s32 %v2170, %v2172
        %v2174 = vrot.slane %v2167, %v2173
        %v2176 = vlaneseq
        %vm2177 = vcmp.ge.s32.totalorder %v2176, 0
        %vm2178 = vcmp.lt.s32.totalorder %v2176, 256
        %vm2179 = vmand %vm2177, %vm2178
        %2180 = vst.msk [vmem:[%s313] sm:$0x3] %vm2179, %v2174
        %s2181 = sand.u32 %s204, 1
        %s2182 = scalar_lea.sflag [#allocation4], %s2181
        %s2183 = sand.u32 %s204, 1
        %s2184 = smul.addr %s2183, 2
        %s2185 = scalar_lea.vmem [#allocation3], %s2184
        // Predicated region
        $region49: #{tpu_custom_call.1} parent=47 // pred_check
          %p2186 = pneg %p214
        $region50: #{tpu_custom_call.1} parent=47 // pred_check_branch
          %2188 = sbr.rel (%p2186) target = $region52
        $region51: #{tpu_custom_call.1} parent=47 // pred_region
          %s2189 = smul.u32 2, %s28
          %s2191 = ssub.s32 32, 32
          %2192 = vsyncadd %s2182, %s2191
          %s2193 = smul.addr %s27, 2
          %s2194 = sadd.s32 %s2189, %s2193
          %s2195 = smul.addr %s2194, 16
          %s2196 = scalar_lea.hbm %s7, %s2195
          %s2198 = sshll.u32 %s2185, 4
          %s2199 = int_to_ptr.vmem [resolvable:$true] %s2198
          %2201 = dma.vmem_to_hbm [thread:$0]  %s2199, 32, %s2196, %s2182
        $region52: #{tpu_custom_call.1} parent=47 // pred_fallthru
          _
      $region48: #{tpu_custom_call.1} parent=5 // pred_fallthru
        _
      %p2202 = scmp.le.s32.totalorder 2, %s18
      // Predicated region
      $region53: #{tpu_custom_call.1} parent=5 // pred_check
        %p2203 = pneg %p2202
      $region54: #{tpu_custom_call.1} parent=5 // pred_check_branch
        %2205 = sbr.rel (%p2203) target = $region56
      $region55: #{tpu_custom_call.1} parent=5 // pred_region
        %s2206 = ssub.s32 %s18, 2
        // Predicated region
        $region57: #{tpu_custom_call.1} parent=55 // pred_check
          %p2207 = pneg %p220
        $region58: #{tpu_custom_call.1} parent=55 // pred_check_branch
          %2209 = sbr.rel (%p2207) target = $region60
        $region59: #{tpu_custom_call.1} parent=55 // pred_region
          %s2210 = sand.u32 %s205, 1
          %s2211 = scalar_lea.sflag [#allocation4], %s2210
          %s2212 = sand.u32 %s205, 1
          %s2213 = smul.addr %s2212, 2
          %s2214 = scalar_lea.vmem [#allocation3], %s2213
          %2215 = dma.done %s2211, 32
        $region60: #{tpu_custom_call.1} parent=55 // pred_fallthru
          _
      $region56: #{tpu_custom_call.1} parent=5 // pred_fallthru
        _
    $region6: #{tpu_custom_call.1} parent=1 // loop_footer
      %s22 = sadd.s32 1, %s18
    $region7: #{tpu_custom_call.1} parent=1 // loop_footer_branch
      %17 = sbr.rel target = $region3
    $region8: #{tpu_custom_call.1} parent=1 // loop_exit
      _
    %2216 = vsyncpa [#allocation4], 1
    %s2217 = scalar_lea.sflag [#allocation4], 1
    %2218 = vsyncpa %s2217, 1

</llo_original>
